<compile_context>
chip_gen: v7x
topology: tpu7x:2x2x1
jax: 0.10.0
libtpu: 0.0.40
codegen_flags: <defaults>
</compile_context>

<pallas_src>
from functools import partial

import jax
import jax.numpy as jnp
from jax import lax
from jax.experimental import pallas as pl
from jax.experimental.pallas import tpu as pltpu


# ----------------------------------------------------------------------------
# helpers
# ----------------------------------------------------------------------------
def _round_up(x, m):
    return ((x + m - 1) // m) * m


def _full_spec(shape):
    return pl.BlockSpec(shape, lambda i: (0,) * len(shape))


# ----------------------------------------------------------------------------
# Fused forward kernel (everything VMEM-resident)
# ----------------------------------------------------------------------------
def _premodel_fused_kernel(a_ref, ux_ref, w1_ref, b1_ref, w2_ref, b2_ref,
                           e2d_ref, dw_ref, db_ref, mids_ref, x_ref,
                           loss_ref, *, alpha, inv_num_mask):
    bf16 = jnp.bfloat16
    f32 = jnp.float32

    # --- encoder layer 1: relu(A_hat @ (X @ W1) + b1) ---
    xw = jnp.dot(ux_ref[...], w1_ref[...], preferred_element_type=f32)
    h = jnp.dot(a_ref[...], xw.astype(bf16), preferred_element_type=f32)
    h = jnp.maximum(h + b1_ref[...], 0.0)

    # --- encoder layer 2: relu(A_hat @ (H @ W2) + b2) ---
    hw = jnp.dot(h.astype(bf16), w2_ref[...], preferred_element_type=f32)
    h2 = jnp.dot(a_ref[...], hw.astype(bf16), preferred_element_type=f32)
    h2 = jnp.maximum(h2 + b2_ref[...], 0.0)

    # --- encoder_to_decoder: rep = H2 @ W^T (nn.Linear, bias=False) ---
    rep = lax.dot_general(h2.astype(bf16), e2d_ref[...],
                          dimension_numbers=(((1,), (1,)), ((), ())),
                          preferred_element_type=f32)

    # --- build the masked-row 0/1 column in-kernel from mask-node ids ---
    # mids_ref: (1, Mp) int32, valid ids in [0, N), padding = -1 (never matches).
    npd = x_ref.shape[0]
    mp = mids_ref.shape[1]
    row_ids = lax.broadcasted_iota(jnp.int32, (npd, mp), 0)
    mask = jnp.sum((row_ids == mids_ref[...]).astype(f32), axis=1, keepdims=True)

    # --- re-mask representations: rep[mask_nodes] = 0 ---
    rep = rep * (1.0 - mask)

    # --- decoder GCN (decoding -> no activation): A_hat @ (rep @ Wd) + bd ---
    rw = jnp.dot(rep.astype(bf16), dw_ref[...], preferred_element_type=f32)
    recon = jnp.dot(a_ref[...], rw.astype(bf16), preferred_element_type=f32) + db_ref[...]

    # --- SCE loss on masked rows: mean over mask of (1 - cos(recon, x))^alpha ---
    xi = x_ref[...]
    eps2 = 1e-24                                          # (F.normalize eps=1e-12)^2
    nr2 = jnp.sum(recon * recon, axis=-1, keepdims=True)
    ni2 = jnp.sum(xi * xi, axis=-1, keepdims=True)
    inv_nr = lax.rsqrt(jnp.maximum(nr2, eps2))            # EUP rsqrt (no sqrt+div)
    inv_ni = lax.rsqrt(jnp.maximum(ni2, eps2))
    cos = jnp.sum(recon * xi, axis=-1, keepdims=True) * inv_nr * inv_ni
    base = 1.0 - cos
    if float(alpha).is_integer() and alpha >= 1:
        per_row = base
        for _ in range(int(alpha) - 1):
            per_row = per_row * base
    else:
        # clamp: bf16 rounding can make cos marginally > 1 -> negative base
        per_row = jnp.power(jnp.maximum(base, 0.0), alpha)
    total = jnp.sum(per_row * mask, axis=0, keepdims=True) * inv_num_mask  # [1,1]
    # lane-dense scalar writeback (avoid a (1,1) masked partial store)
    loss_ref[...] = jnp.broadcast_to(total, loss_ref.shape)


# ----------------------------------------------------------------------------
# Static operand preparation: pad + bf16-cast ONCE at init (fixed graph/weights)
# ----------------------------------------------------------------------------
def make_static_operands(params, a_hat):
    n = a_hat.shape[0]
    in_dim, hid = params["enc_w1"].shape
    npad = _round_up(n, 16)          # bf16 native sublane tile is (16, 128)
    fp = _round_up(in_dim, 128)
    hp = _round_up(hid, 128)

    def pad2(arr, r, c, dtype=None):
        out = jnp.pad(arr, ((0, r - arr.shape[0]), (0, c - arr.shape[1])))
        return out.astype(dtype) if dtype is not None else out

    bf16 = jnp.bfloat16
    return {
        "a": pad2(a_hat, npad, npad, bf16),
        "enc_w1": pad2(params["enc_w1"], fp, hp, bf16),
        "enc_b1": pad2(params["enc_b1"], 1, hp),
        "enc_w2": pad2(params["enc_w2"], hp, hp, bf16),
        "enc_b2": pad2(params["enc_b2"], 1, hp),
        "e2d_w": pad2(params["e2d_w"], hp, hp, bf16),     # nn.Linear weight [out,in]
        "dec_w": pad2(params["dec_w"], hp, fp, bf16),
        "dec_b": pad2(params["dec_b"], 1, fp),
    }


# ----------------------------------------------------------------------------
# pallas_call wrapper (only dynamic operands are padded per step)
# ----------------------------------------------------------------------------
def fused_mask_attr_prediction(static_ops, use_x, x, mask_ids, *,
                               alpha, num_mask_nodes):
    n, in_dim = x.shape
    npad = static_ops["a"].shape[0]
    fp = static_ops["dec_w"].shape[1]
    hp = static_ops["enc_w1"].shape[1]

    def padnf(arr, dtype=None):
        out = jnp.pad(arr, ((0, npad - n), (0, fp - in_dim)))
        return out.astype(dtype) if dtype is not None else out

    ux_p = padnf(use_x, jnp.bfloat16)
    x_p = padnf(x)                                        # f32, loss only

    inputs = [static_ops["a"], ux_p, static_ops["enc_w1"], static_ops["enc_b1"],
              static_ops["enc_w2"], static_ops["enc_b2"], static_ops["e2d_w"],
              static_ops["dec_w"], static_ops["dec_b"], mask_ids, x_p]

    flops = 2 * npad * (fp * hp + npad * hp + hp * hp + npad * hp
                        + hp * hp + hp * fp + npad * fp)
    bytes_accessed = int(sum(t.size * t.dtype.itemsize for t in inputs) + 4 * 128)
    cost = pl.CostEstimate(flops=flops, transcendentals=2 * npad,
                           bytes_accessed=bytes_accessed)

    # TODO(synk): for large N, row-tile A_hat/X/outputs with a "parallel" grid
    # axis (engages v7x's 2 TensorCores) and an "arbitrary" contraction axis;
    # size tiles against v7x's 64 MiB physical / 32 MiB default-scoped VMEM.
    # TODO(synk): for throughput on v6e/v7x (256x256 MXU), batch multiple mask
    # draws / graphs along the row dim so M >= 256 per matmul.
    out = pl.pallas_call(
        partial(_premodel_fused_kernel, alpha=alpha,
                inv_num_mask=1.0 / float(num_mask_nodes)),
        out_shape=jax.ShapeDtypeStruct((1, 128), jnp.float32),
        grid=(1,),
        in_specs=[_full_spec(t.shape) for t in inputs],
        out_specs=_full_spec((1, 128)),
        compiler_params=pltpu.CompilerParams(dimension_semantics=("arbitrary",)),
        cost_estimate=cost,
    )(*inputs)
    return out[0, 0]


# ----------------------------------------------------------------------------
# PreModel config / params / masking glue (plain JAX)
# ----------------------------------------------------------------------------
class PreModelConfig:
    def __init__(self, num_nodes, in_dim, num_hidden):
        self.num_nodes = num_nodes
        self.in_dim = in_dim
        self.num_hidden = num_hidden
        self.num_layers = 2
        self.nhead = 4
        self.nhead_out = 1
        self.replace_rate = 0.1
        self.mask_token_rate = 1.0 - self.replace_rate
        self.alpha_l = 2
        self.keep_num_ratio = 1.0
        self.mask_num_ratio = 1.0
        kc, ki, mc, mi = 0.1, 0.1, 0.9, 0.1
        self.keep_low = int(num_nodes * kc) - int(num_nodes * ki)
        self.keep_high = int(num_nodes * kc) + int(num_nodes * ki)
        self.mask_low = int(num_nodes * mc) - int(num_nodes * mi)
        self.mask_high = int(num_nodes * mc) + int(num_nodes * mi)
        assert self.keep_low >= 0
        assert (self.keep_high >= self.keep_low) and (self.keep_high <= self.mask_low)
        assert (self.mask_high <= num_nodes) and (self.mask_high >= self.mask_low)
        assert num_hidden % self.nhead == 0 and num_hidden % self.nhead_out == 0


def init_params(key, cfg):
    in_dim, hid = cfg.in_dim, cfg.num_hidden
    ks = jax.random.split(key, 5)

    def glorot(k, shape):
        fan_in, fan_out = shape[0], shape[1]
        lim = (6.0 / (fan_in + fan_out)) ** 0.5
        return jax.random.uniform(k, shape, jnp.float32, -lim, lim)

    return {
        "enc_w1": glorot(ks[0], (in_dim, hid)),
        "enc_b1": jnp.zeros((1, hid), jnp.float32),
        "enc_w2": glorot(ks[1], (hid, hid)),
        "enc_b2": jnp.zeros((1, hid), jnp.float32),
        "e2d_w": glorot(ks[2], (hid, hid)),          # nn.Linear weight [out, in]
        "dec_w": glorot(ks[3], (hid, in_dim)),
        "dec_b": jnp.zeros((1, in_dim), jnp.float32),
        "enc_mask_token": jnp.zeros((1, in_dim), jnp.float32),
    }


def encoding_mask_noise(params, cfg, key, x, final_score):
    # mask_strategy='degree', scheme='fix': sort nodes by score and slice scopes.
    n = x.shape[0]
    idx_sorted_all = jnp.argsort(final_score)
    keep_scope = idx_sorted_all[cfg.keep_low:cfg.keep_high]
    mask_scope = idx_sorted_all[cfg.mask_low:cfg.mask_high]

    k1, k2, k3, k4 = jax.random.split(key, 4)
    perm_keep = jax.random.permutation(k1, keep_scope.shape[0])
    perm_mask = jax.random.permutation(k2, mask_scope.shape[0])
    num_keep = int(keep_scope.shape[0] * cfg.keep_num_ratio)
    num_mask_nodes = int(mask_scope.shape[0] * cfg.mask_num_ratio)
    keep_nodes = keep_scope[perm_keep[:num_keep]]
    mask_nodes = mask_scope[perm_mask[:num_mask_nodes]]

    if cfg.replace_rate > 0:
        num_noise_nodes = int(cfg.replace_rate * num_mask_nodes)
        perm2 = jax.random.permutation(k3, num_mask_nodes)
        token_nodes = mask_nodes[perm2[: int(cfg.mask_token_rate * num_mask_nodes)]]
        noise_nodes = mask_nodes[perm2[-num_noise_nodes:]]
        noise_to_be_chosen = jax.random.permutation(k4, n)[:num_noise_nodes]
        out_x = jnp.zeros_like(x)
        out_x = out_x.at[keep_nodes].set(x[keep_nodes])
        out_x = out_x.at[token_nodes].set(0.0)
        out_x = out_x.at[noise_nodes].set(x[noise_to_be_chosen])
    else:
        out_x = jnp.zeros_like(x)
        out_x = out_x.at[keep_nodes].set(x[keep_nodes])
        token_nodes = mask_nodes
        out_x = out_x.at[mask_nodes].set(0.0)
    out_x = out_x.at[token_nodes].add(params["enc_mask_token"][0])
    return out_x, mask_nodes, keep_nodes


@partial(jax.jit, static_argnums=(2,))
def premodel_forward(static_ops, params, cfg, x, final_score, key):
    """Equivalent of PreModel.mask_attr_prediction (returns scalar loss)."""
    use_x, mask_nodes, _keep_nodes = encoding_mask_noise(params, cfg, key, x, final_score)
    num_mask = int(mask_nodes.shape[0])
    mp = _round_up(max(num_mask, 1), 128)
    # mask-node ids as a tiny lane-padded int32 row; kernel builds the 0/1 column
    mask_ids = jnp.pad(mask_nodes.astype(jnp.int32)[None, :],
                       ((0, 0), (0, mp - num_mask)), constant_values=-1)
    return fused_mask_attr_prediction(static_ops, use_x, x, mask_ids,
                                      alpha=cfg.alpha_l, num_mask_nodes=num_mask)


# ----------------------------------------------------------------------------
# Pure-JAX reference (same bf16 matmul policy, gather-based loss) for checking
# ----------------------------------------------------------------------------
def reference_loss(params, cfg, a_hat, x, final_score, key):
    use_x, mask_nodes, _ = encoding_mask_noise(params, cfg, key, x, final_score)
    bf16, f32 = jnp.bfloat16, jnp.float32

    def mm(p, q):
        return jnp.dot(p.astype(bf16), q.astype(bf16), preferred_element_type=f32)

    h = jnp.maximum(mm(a_hat, mm(use_x, params["enc_w1"])) + params["enc_b1"], 0.0)
    h2 = jnp.maximum(mm(a_hat, mm(h, params["enc_w2"])) + params["enc_b2"], 0.0)
    rep = mm(h2, params["e2d_w"].T)
    rep = rep.at[mask_nodes].set(0.0)
    recon = mm(a_hat, mm(rep, params["dec_w"])) + params["dec_b"]

    x_init = x[mask_nodes]
    x_rec = recon[mask_nodes]

    def normalize(v):
        nrm = jnp.sqrt(jnp.sum(v * v, axis=-1, keepdims=True))
        return v / jnp.maximum(nrm, 1e-12)

    cos = jnp.sum(normalize(x_rec) * normalize(x_init), axis=-1)
    return jnp.mean((1.0 - cos) ** cfg.alpha_l)


# ----------------------------------------------------------------------------
# main
# ----------------------------------------------------------------------------
if __name__ == "__main__":
    NUM_NODES, IN_DIM, NUM_HIDDEN = 128, 32, 64
    cfg = PreModelConfig(NUM_NODES, IN_DIM, NUM_HIDDEN)

    root = jax.random.PRNGKey(0)
    k_param, k_x, k_adj, k_score, k_mask = jax.random.split(root, 5)

    params = init_params(k_param, cfg)

    # node features
    x = jax.random.normal(k_x, (NUM_NODES, IN_DIM), jnp.float32)

    # random symmetric graph, self-loops, GCN normalization A_hat = D^-1/2 (A+I) D^-1/2
    a = (jax.random.uniform(k_adj, (NUM_NODES, NUM_NODES)) < 0.05).astype(jnp.float32)
    a = jnp.maximum(a, a.T)
    a = a + jnp.eye(NUM_NODES, dtype=jnp.float32)
    deg = jnp.sum(a, axis=1)
    d_inv_sqrt = 1.0 / jnp.sqrt(deg)
    a_hat = a * d_inv_sqrt[:, None] * d_inv_sqrt[None, :]

    # g.ndata['final_score'] proxy: degree-based score (mask_strategy='degree')
    final_score = deg + 0.01 * jax.random.normal(k_score, (NUM_NODES,), jnp.float32)

    # static operands: padded + bf16-cast once (graph & weights are fixed here)
    static_ops = make_static_operands(params, a_hat)

    # TODO(synk): GAT/DotGAT/GIN/MLP encoder-decoder variants, DGL drop_edge /
    # g.clone and the 'sample' (multinomial) mask scheme are not reproduced;
    # the 'gcn' encoder/decoder + 'fix' scheme path is implemented.
    loss = premodel_forward(static_ops, params, cfg, x, final_score, k_mask)
    loss = jax.block_until_ready(loss)
    assert jnp.isfinite(loss), "loss is not finite"

    ref = float(reference_loss(params, cfg, a_hat, x, final_score, k_mask))
    assert abs(float(loss) - ref) <= 1e-3 + 1e-3 * abs(ref), (float(loss), ref)

    print("KERNEL_OK")
</pallas_src>

<mosaic_0001>
module attributes {stable_mosaic.version = 11 : i64} {
  func.func @_premodel_fused_kernel(%arg0: i32, %arg1: memref<128x128xbf16, #tpu.memory_space<vmem>>, %arg2: memref<128x128xbf16, #tpu.memory_space<vmem>>, %arg3: memref<128x128xbf16, #tpu.memory_space<vmem>>, %arg4: memref<1x128xf32, #tpu.memory_space<vmem>>, %arg5: memref<128x128xbf16, #tpu.memory_space<vmem>>, %arg6: memref<1x128xf32, #tpu.memory_space<vmem>>, %arg7: memref<128x128xbf16, #tpu.memory_space<vmem>>, %arg8: memref<128x128xbf16, #tpu.memory_space<vmem>>, %arg9: memref<1x128xf32, #tpu.memory_space<vmem>>, %arg10: memref<1x128xi32, #tpu.memory_space<vmem>>, %arg11: memref<128x128xf32, #tpu.memory_space<vmem>>, %arg12: memref<1x128xf32, #tpu.memory_space<vmem>>) attributes {dimension_semantics = [#tpu.dimension_semantics<arbitrary>], iteration_bounds = array<i64: 1>, scalar_prefetch = 0 : i64, scratch_operands = 0 : i64, tpu.core_type = #tpu.core_type<tc>, window_params = [{pipeline_mode = #tpu.pipeline_mode<synchronous>, transform_indices = @transform_0, window_bounds = array<i64: 128, 128>}, {pipeline_mode = #tpu.pipeline_mode<synchronous>, transform_indices = @transform_1, window_bounds = array<i64: 128, 128>}, {pipeline_mode = #tpu.pipeline_mode<synchronous>, transform_indices = @transform_2, window_bounds = array<i64: 128, 128>}, {pipeline_mode = #tpu.pipeline_mode<synchronous>, transform_indices = @transform_3, window_bounds = array<i64: 1, 128>}, {pipeline_mode = #tpu.pipeline_mode<synchronous>, transform_indices = @transform_4, window_bounds = array<i64: 128, 128>}, {pipeline_mode = #tpu.pipeline_mode<synchronous>, transform_indices = @transform_5, window_bounds = array<i64: 1, 128>}, {pipeline_mode = #tpu.pipeline_mode<synchronous>, transform_indices = @transform_6, window_bounds = array<i64: 128, 128>}, {pipeline_mode = #tpu.pipeline_mode<synchronous>, transform_indices = @transform_7, window_bounds = array<i64: 128, 128>}, {pipeline_mode = #tpu.pipeline_mode<synchronous>, transform_indices = @transform_8, window_bounds = array<i64: 1, 128>}, {pipeline_mode = #tpu.pipeline_mode<synchronous>, transform_indices = @transform_9, window_bounds = array<i64: 1, 128>}, {pipeline_mode = #tpu.pipeline_mode<synchronous>, transform_indices = @transform_10, window_bounds = array<i64: 128, 128>}, {pipeline_mode = #tpu.pipeline_mode<synchronous>, transform_indices = @transform_11, window_bounds = array<i64: 1, 128>}]} {
    %c0 = arith.constant 0 : index
    %c0_0 = arith.constant 0 : index
    %0 = vector.load %arg2[%c0, %c0_0] : memref<128x128xbf16, #tpu.memory_space<vmem>>, vector<128x128xbf16>
    %c0_1 = arith.constant 0 : index
    %c0_2 = arith.constant 0 : index
    %1 = vector.load %arg3[%c0_1, %c0_2] : memref<128x128xbf16, #tpu.memory_space<vmem>>, vector<128x128xbf16>
    %cst = arith.constant dense<0.000000e+00> : vector<128x128xf32>
    %2 = tpu.matmul %0, %1, %cst {dimension_numbers = #tpu.dot_dimension_numbers<[1], [0], [0], [1], [0, 0, 1, 1], [], []>} : vector<128x128xbf16>, vector<128x128xbf16>, vector<128x128xf32> -> vector<128x128xf32>
    %c0_3 = arith.constant 0 : index
    %c0_4 = arith.constant 0 : index
    %3 = vector.load %arg1[%c0_3, %c0_4] : memref<128x128xbf16, #tpu.memory_space<vmem>>, vector<128x128xbf16>
    %4 = arith.truncf %2 : vector<128x128xf32> to vector<128x128xbf16>
    %cst_5 = arith.constant dense<0.000000e+00> : vector<128x128xf32>
    %5 = tpu.matmul %3, %4, %cst_5 {dimension_numbers = #tpu.dot_dimension_numbers<[1], [0], [0], [1], [0, 0, 1, 1], [], []>} : vector<128x128xbf16>, vector<128x128xbf16>, vector<128x128xf32> -> vector<128x128xf32>
    %c0_6 = arith.constant 0 : index
    %c0_7 = arith.constant 0 : index
    %6 = vector.load %arg4[%c0_6, %c0_7] : memref<1x128xf32, #tpu.memory_space<vmem>>, vector<1x128xf32>
    %7 = vector.broadcast %6 : vector<1x128xf32> to vector<128x128xf32>
    %8 = arith.addf %5, %7 : vector<128x128xf32>
    %cst_8 = arith.constant 0.000000e+00 : f32
    %9 = vector.broadcast %cst_8 : f32 to vector<128x128xf32>
    %10 = arith.maximumf %8, %9 : vector<128x128xf32>
    %11 = arith.truncf %10 : vector<128x128xf32> to vector<128x128xbf16>
    %c0_9 = arith.constant 0 : index
    %c0_10 = arith.constant 0 : index
    %12 = vector.load %arg5[%c0_9, %c0_10] : memref<128x128xbf16, #tpu.memory_space<vmem>>, vector<128x128xbf16>
    %cst_11 = arith.constant dense<0.000000e+00> : vector<128x128xf32>
    %13 = tpu.matmul %11, %12, %cst_11 {dimension_numbers = #tpu.dot_dimension_numbers<[1], [0], [0], [1], [0, 0, 1, 1], [], []>} : vector<128x128xbf16>, vector<128x128xbf16>, vector<128x128xf32> -> vector<128x128xf32>
    %c0_12 = arith.constant 0 : index
    %c0_13 = arith.constant 0 : index
    %14 = vector.load %arg1[%c0_12, %c0_13] : memref<128x128xbf16, #tpu.memory_space<vmem>>, vector<128x128xbf16>
    %15 = arith.truncf %13 : vector<128x128xf32> to vector<128x128xbf16>
    %cst_14 = arith.constant dense<0.000000e+00> : vector<128x128xf32>
    %16 = tpu.matmul %14, %15, %cst_14 {dimension_numbers = #tpu.dot_dimension_numbers<[1], [0], [0], [1], [0, 0, 1, 1], [], []>} : vector<128x128xbf16>, vector<128x128xbf16>, vector<128x128xf32> -> vector<128x128xf32>
    %c0_15 = arith.constant 0 : index
    %c0_16 = arith.constant 0 : index
    %17 = vector.load %arg6[%c0_15, %c0_16] : memref<1x128xf32, #tpu.memory_space<vmem>>, vector<1x128xf32>
    %18 = vector.broadcast %17 : vector<1x128xf32> to vector<128x128xf32>
    %19 = arith.addf %16, %18 : vector<128x128xf32>
    %cst_17 = arith.constant 0.000000e+00 : f32
    %20 = vector.broadcast %cst_17 : f32 to vector<128x128xf32>
    %21 = arith.maximumf %19, %20 : vector<128x128xf32>
    %22 = arith.truncf %21 : vector<128x128xf32> to vector<128x128xbf16>
    %c0_18 = arith.constant 0 : index
    %c0_19 = arith.constant 0 : index
    %23 = vector.load %arg7[%c0_18, %c0_19] : memref<128x128xbf16, #tpu.memory_space<vmem>>, vector<128x128xbf16>
    %cst_20 = arith.constant dense<0.000000e+00> : vector<128x128xf32>
    %24 = tpu.matmul %22, %23, %cst_20 {dimension_numbers = #tpu.dot_dimension_numbers<[1], [1], [0], [0], [0, 0, 1, 0], [], []>} : vector<128x128xbf16>, vector<128x128xbf16>, vector<128x128xf32> -> vector<128x128xf32>
    %25 = tpu.iota {dimensions = array<i32: 0>} : vector<128x128xi32>
    %c0_21 = arith.constant 0 : index
    %c0_22 = arith.constant 0 : index
    %26 = vector.load %arg10[%c0_21, %c0_22] : memref<1x128xi32, #tpu.memory_space<vmem>>, vector<1x128xi32>
    %27 = vector.broadcast %26 : vector<1x128xi32> to vector<128x128xi32>
    %28 = arith.cmpi eq, %25, %27 : vector<128x128xi32>
    %29 = arith.extui %28 : vector<128x128xi1> to vector<128x128xi32>
    %30 = arith.sitofp %29 : vector<128x128xi32> to vector<128x128xf32>
    %cst_23 = arith.constant dense<0.000000e+00> : vector<128xf32>
    %31 = vector.multi_reduction <add>, %30, %cst_23 [1] : vector<128x128xf32> to vector<128xf32>
    %32 = vector.shape_cast %31 : vector<128xf32> to vector<128x1xf32>
    %cst_24 = arith.constant 1.000000e+00 : f32
    %33 = vector.broadcast %cst_24 : f32 to vector<128x1xf32>
    %34 = arith.subf %33, %32 : vector<128x1xf32>
    %35 = vector.broadcast %34 : vector<128x1xf32> to vector<128x128xf32>
    %36 = arith.mulf %24, %35 : vector<128x128xf32>
    %37 = arith.truncf %36 : vector<128x128xf32> to vector<128x128xbf16>
    %c0_25 = arith.constant 0 : index
    %c0_26 = arith.constant 0 : index
    %38 = vector.load %arg8[%c0_25, %c0_26] : memref<128x128xbf16, #tpu.memory_space<vmem>>, vector<128x128xbf16>
    %cst_27 = arith.constant dense<0.000000e+00> : vector<128x128xf32>
    %39 = tpu.matmul %37, %38, %cst_27 {dimension_numbers = #tpu.dot_dimension_numbers<[1], [0], [0], [1], [0, 0, 1, 1], [], []>} : vector<128x128xbf16>, vector<128x128xbf16>, vector<128x128xf32> -> vector<128x128xf32>
    %c0_28 = arith.constant 0 : index
    %c0_29 = arith.constant 0 : index
    %40 = vector.load %arg1[%c0_28, %c0_29] : memref<128x128xbf16, #tpu.memory_space<vmem>>, vector<128x128xbf16>
    %41 = arith.truncf %39 : vector<128x128xf32> to vector<128x128xbf16>
    %cst_30 = arith.constant dense<0.000000e+00> : vector<128x128xf32>
    %42 = tpu.matmul %40, %41, %cst_30 {dimension_numbers = #tpu.dot_dimension_numbers<[1], [0], [0], [1], [0, 0, 1, 1], [], []>} : vector<128x128xbf16>, vector<128x128xbf16>, vector<128x128xf32> -> vector<128x128xf32>
    %c0_31 = arith.constant 0 : index
    %c0_32 = arith.constant 0 : index
    %43 = vector.load %arg9[%c0_31, %c0_32] : memref<1x128xf32, #tpu.memory_space<vmem>>, vector<1x128xf32>
    %44 = vector.broadcast %43 : vector<1x128xf32> to vector<128x128xf32>
    %45 = arith.addf %42, %44 : vector<128x128xf32>
    %c0_33 = arith.constant 0 : index
    %c0_34 = arith.constant 0 : index
    %46 = vector.load %arg11[%c0_33, %c0_34] : memref<128x128xf32, #tpu.memory_space<vmem>>, vector<128x128xf32>
    %47 = arith.mulf %45, %45 : vector<128x128xf32>
    %cst_35 = arith.constant dense<0.000000e+00> : vector<128xf32>
    %48 = vector.multi_reduction <add>, %47, %cst_35 [1] : vector<128x128xf32> to vector<128xf32>
    %49 = vector.shape_cast %48 : vector<128xf32> to vector<128x1xf32>
    %50 = arith.mulf %46, %46 : vector<128x128xf32>
    %cst_36 = arith.constant dense<0.000000e+00> : vector<128xf32>
    %51 = vector.multi_reduction <add>, %50, %cst_36 [1] : vector<128x128xf32> to vector<128xf32>
    %52 = vector.shape_cast %51 : vector<128xf32> to vector<128x1xf32>
    %cst_37 = arith.constant 1.000000e-24 : f32
    %53 = vector.broadcast %cst_37 : f32 to vector<128x1xf32>
    %54 = arith.maximumf %49, %53 : vector<128x1xf32>
    %55 = math.rsqrt %54 : vector<128x1xf32>
    %cst_38 = arith.constant 1.000000e-24 : f32
    %56 = vector.broadcast %cst_38 : f32 to vector<128x1xf32>
    %57 = arith.maximumf %52, %56 : vector<128x1xf32>
    %58 = math.rsqrt %57 : vector<128x1xf32>
    %59 = arith.mulf %45, %46 : vector<128x128xf32>
    %cst_39 = arith.constant dense<0.000000e+00> : vector<128xf32>
    %60 = vector.multi_reduction <add>, %59, %cst_39 [1] : vector<128x128xf32> to vector<128xf32>
    %61 = vector.shape_cast %60 : vector<128xf32> to vector<128x1xf32>
    %62 = arith.mulf %61, %55 : vector<128x1xf32>
    %63 = arith.mulf %62, %58 : vector<128x1xf32>
    %cst_40 = arith.constant 1.000000e+00 : f32
    %64 = vector.broadcast %cst_40 : f32 to vector<128x1xf32>
    %65 = arith.subf %64, %63 : vector<128x1xf32>
    %66 = arith.mulf %65, %65 : vector<128x1xf32>
    %67 = arith.mulf %66, %32 : vector<128x1xf32>
    %cst_41 = arith.constant dense<0.000000e+00> : vector<1xf32>
    %68 = vector.multi_reduction <add>, %67, %cst_41 [0] : vector<128x1xf32> to vector<1xf32>
    %69 = vector.shape_cast %68 : vector<1xf32> to vector<1x1xf32>
    %cst_42 = arith.constant 0.0416666679 : f32
    %70 = vector.broadcast %cst_42 : f32 to vector<1x1xf32>
    %71 = arith.mulf %69, %70 : vector<1x1xf32>
    %72 = vector.shape_cast %71 : vector<1x1xf32> to vector<1x1xf32>
    %73 = vector.broadcast %72 : vector<1x1xf32> to vector<1x128xf32>
    %c0_43 = arith.constant 0 : index
    %c0_44 = arith.constant 0 : index
    %74 = vector.load %arg12[%c0_43, %c0_44] : memref<1x128xf32, #tpu.memory_space<vmem>>, vector<1x128xf32>
    tpu.vector_store %arg12[%c0_43, %c0_44], %73 {strides = array<i32>} : memref<1x128xf32, #tpu.memory_space<vmem>>, vector<1x128xf32>,
    return
  }
  func.func @transform_0(%arg0: i32) -> (i32, i32) {
    %c0_i32 = arith.constant 0 : i32
    %c0_i32_0 = arith.constant 0 : i32
    %c0_i32_1 = arith.constant 0 : i32
    return %c0_i32, %c0_i32_0 : i32, i32
  }
  func.func @transform_1(%arg0: i32) -> (i32, i32) {
    %c0_i32 = arith.constant 0 : i32
    %c0_i32_0 = arith.constant 0 : i32
    %c0_i32_1 = arith.constant 0 : i32
    return %c0_i32, %c0_i32_0 : i32, i32
  }
  func.func @transform_2(%arg0: i32) -> (i32, i32) {
    %c0_i32 = arith.constant 0 : i32
    %c0_i32_0 = arith.constant 0 : i32
    %c0_i32_1 = arith.constant 0 : i32
    return %c0_i32, %c0_i32_0 : i32, i32
  }
  func.func @transform_3(%arg0: i32) -> (i32, i32) {
    %c0_i32 = arith.constant 0 : i32
    %c0_i32_0 = arith.constant 0 : i32
    %c0_i32_1 = arith.constant 0 : i32
    return %c0_i32, %c0_i32_0 : i32, i32
  }
  func.func @transform_4(%arg0: i32) -> (i32, i32) {
    %c0_i32 = arith.constant 0 : i32
    %c0_i32_0 = arith.constant 0 : i32
    %c0_i32_1 = arith.constant 0 : i32
    return %c0_i32, %c0_i32_0 : i32, i32
  }
  func.func @transform_5(%arg0: i32) -> (i32, i32) {
    %c0_i32 = arith.constant 0 : i32
    %c0_i32_0 = arith.constant 0 : i32
    %c0_i32_1 = arith.constant 0 : i32
    return %c0_i32, %c0_i32_0 : i32, i32
  }
  func.func @transform_6(%arg0: i32) -> (i32, i32) {
    %c0_i32 = arith.constant 0 : i32
    %c0_i32_0 = arith.constant 0 : i32
    %c0_i32_1 = arith.constant 0 : i32
    return %c0_i32, %c0_i32_0 : i32, i32
  }
  func.func @transform_7(%arg0: i32) -> (i32, i32) {
    %c0_i32 = arith.constant 0 : i32
    %c0_i32_0 = arith.constant 0 : i32
    %c0_i32_1 = arith.constant 0 : i32
    return %c0_i32, %c0_i32_0 : i32, i32
  }
  func.func @transform_8(%arg0: i32) -> (i32, i32) {
    %c0_i32 = arith.constant 0 : i32
    %c0_i32_0 = arith.constant 0 : i32
    %c0_i32_1 = arith.constant 0 : i32
    return %c0_i32, %c0_i32_0 : i32, i32
  }
  func.func @transform_9(%arg0: i32) -> (i32, i32) {
    %c0_i32 = arith.constant 0 : i32
    %c0_i32_0 = arith.constant 0 : i32
    %c0_i32_1 = arith.constant 0 : i32
    return %c0_i32, %c0_i32_0 : i32, i32
  }
  func.func @transform_10(%arg0: i32) -> (i32, i32) {
    %c0_i32 = arith.constant 0 : i32
    %c0_i32_0 = arith.constant 0 : i32
    %c0_i32_1 = arith.constant 0 : i32
    return %c0_i32, %c0_i32_0 : i32, i32
  }
  func.func @transform_11(%arg0: i32) -> (i32, i32) {
    %c0_i32 = arith.constant 0 : i32
    %c0_i32_0 = arith.constant 0 : i32
    %c0_i32_1 = arith.constant 0 : i32
    return %c0_i32, %c0_i32_0 : i32, i32
  }
}

</mosaic_0001>

<llo_original>
// kernel: premodel_forward.1
$region0: #{premodel_forward.1}
  #allocation0 [shape = 'u32[]', space=smem, size = 0x4, offset = 0x4, fixed_abs, tag = 'smem constant byte address 0x4 - core index']
  #allocation1 [shape = 'u32[144,128]{1,0:T(1,128)}', space=vmem, size = 0x12000, scoped, tag = 'internal scratch']
  %s0 = inlined_call_operand.vmem [shape: bf16[128,128], index: 0, kind: input, shape index: {}]
  %s1 = inlined_call_operand.vmem [shape: bf16[128,128], index: 1, kind: input, shape index: {}]
  %s2 = inlined_call_operand.vmem [shape: bf16[128,128], index: 2, kind: input, shape index: {}]
  %s3 = inlined_call_operand.vmem [shape: f32[1,128], index: 3, kind: input, shape index: {}]
  %s4 = inlined_call_operand.vmem [shape: bf16[128,128], index: 4, kind: input, shape index: {}]
  %s5 = inlined_call_operand.vmem [shape: f32[1,128], index: 5, kind: input, shape index: {}]
  %s6 = inlined_call_operand.vmem [shape: bf16[128,128], index: 6, kind: input, shape index: {}]
  %s7 = inlined_call_operand.vmem [shape: bf16[128,128], index: 7, kind: input, shape index: {}]
  %s8 = inlined_call_operand.vmem [shape: f32[1,128], index: 8, kind: input, shape index: {}]
  %s9 = inlined_call_operand.vmem [shape: s32[1,128], index: 9, kind: input, shape index: {}]
  %s10 = inlined_call_operand.vmem [shape: f32[128,128], index: 10, kind: input, shape index: {}]
  %s11 = inlined_call_operand.hbm [shape: f32[1,128], index: 11, kind: output, shape index: {}]
  %s12 = sld [smem:[#allocation0]]
  $region54: #{premodel_forward.1} parent=0
    _
  %s14 = ssub.s32 1, %s12
  %s15 = scalar_select 0, %s14, %s12
  $region1: #{premodel_forward.1} parent=0
    #allocation2 [shape = 'u8[512]{0}', space=vmem, size = 0x400, scoped, tag = 'output window, operand 0, single buffered']
    #allocation3 [shape = 's32[1]{0}', space=sflag, size = 0x4, scoped, tag = 'scoped memory for premodel_forward.1']
    %16 = vsyncpa [#allocation3], 0
    // Predicated region
    $region2: #{premodel_forward.1} parent=1 // pred_check
      _
    $region3: #{premodel_forward.1} parent=1 // pred_check_branch
      %18 = sbr.rel (0) target = $region5
    $region4: #{premodel_forward.1} parent=1 // pred_region
      _
    $region5: #{premodel_forward.1} parent=1 // pred_fallthru
      _
    // Predicated region
    $region6: #{premodel_forward.1} parent=1 // pred_check
      _
    $region7: #{premodel_forward.1} parent=1 // pred_check_branch
      %20 = sbr.rel (0) target = $region9
    $region8: #{premodel_forward.1} parent=1 // pred_region
      _
    $region9: #{premodel_forward.1} parent=1 // pred_fallthru
      _
    // Predicated region
    $region10: #{premodel_forward.1} parent=1 // pred_check
      _
    $region11: #{premodel_forward.1} parent=1 // pred_check_branch
      %22 = sbr.rel (0) target = $region13
    $region12: #{premodel_forward.1} parent=1 // pred_region
      _
    $region13: #{premodel_forward.1} parent=1 // pred_fallthru
      _
    // Predicated region
    $region14: #{premodel_forward.1} parent=1 // pred_check
      _
    $region15: #{premodel_forward.1} parent=1 // pred_check_branch
      %24 = sbr.rel (0) target = $region17
    $region16: #{premodel_forward.1} parent=1 // pred_region
      _
    $region17: #{premodel_forward.1} parent=1 // pred_fallthru
      _
    // Predicated region
    $region18: #{premodel_forward.1} parent=1 // pred_check
      _
    $region19: #{premodel_forward.1} parent=1 // pred_check_branch
      %26 = sbr.rel (0) target = $region21
    $region20: #{premodel_forward.1} parent=1 // pred_region
      _
    $region21: #{premodel_forward.1} parent=1 // pred_fallthru
      _
    // Predicated region
    $region22: #{premodel_forward.1} parent=1 // pred_check
      _
    $region23: #{premodel_forward.1} parent=1 // pred_check_branch
      %28 = sbr.rel (0) target = $region25
    $region24: #{premodel_forward.1} parent=1 // pred_region
      _
    $region25: #{premodel_forward.1} parent=1 // pred_fallthru
      _
    // Predicated region
    $region26: #{premodel_forward.1} parent=1 // pred_check
      _
    $region27: #{premodel_forward.1} parent=1 // pred_check_branch
      %30 = sbr.rel (0) target = $region29
    $region28: #{premodel_forward.1} parent=1 // pred_region
      _
    $region29: #{premodel_forward.1} parent=1 // pred_fallthru
      _
    // Predicated region
    $region30: #{premodel_forward.1} parent=1 // pred_check
      _
    $region31: #{premodel_forward.1} parent=1 // pred_check_branch
      %32 = sbr.rel (0) target = $region33
    $region32: #{premodel_forward.1} parent=1 // pred_region
      _
    $region33: #{premodel_forward.1} parent=1 // pred_fallthru
      _
    // Predicated region
    $region34: #{premodel_forward.1} parent=1 // pred_check
      _
    $region35: #{premodel_forward.1} parent=1 // pred_check_branch
      %34 = sbr.rel (0) target = $region37
    $region36: #{premodel_forward.1} parent=1 // pred_region
      _
    $region37: #{premodel_forward.1} parent=1 // pred_fallthru
      _
    // Predicated region
    $region38: #{premodel_forward.1} parent=1 // pred_check
      _
    $region39: #{premodel_forward.1} parent=1 // pred_check_branch
      %36 = sbr.rel (0) target = $region41
    $region40: #{premodel_forward.1} parent=1 // pred_region
      _
    $region41: #{premodel_forward.1} parent=1 // pred_fallthru
      _
    // Predicated region
    $region42: #{premodel_forward.1} parent=1 // pred_check
      _
    $region43: #{premodel_forward.1} parent=1 // pred_check_branch
      %38 = sbr.rel (0) target = $region45
    $region44: #{premodel_forward.1} parent=1 // pred_region
      _
    $region45: #{premodel_forward.1} parent=1 // pred_fallthru
      _
    %v40 = vld [vmem:[%s1] sm:$0xf]
    %v41 = vld [vmem:[%s1 + $0x4] sm:$0xf]
    %v42 = vld [vmem:[%s1 + $0x8] sm:$0xf]
    %v43 = vld [vmem:[%s1 + $0xc] sm:$0xf]
    %v44 = vld [vmem:[%s1 + $0x10] sm:$0xf]
    %v45 = vld [vmem:[%s1 + $0x14] sm:$0xf]
    %v46 = vld [vmem:[%s1 + $0x18] sm:$0xf]
    %v47 = vld [vmem:[%s1 + $0x1c] sm:$0xf]
    %v48 = vld [vmem:[%s1 + $0x20] sm:$0xf]
    %v49 = vld [vmem:[%s1 + $0x24] sm:$0xf]
    %v50 = vld [vmem:[%s1 + $0x28] sm:$0xf]
    %v51 = vld [vmem:[%s1 + $0x2c] sm:$0xf]
    %v52 = vld [vmem:[%s1 + $0x30] sm:$0xf]
    %v53 = vld [vmem:[%s1 + $0x34] sm:$0xf]
    %v54 = vld [vmem:[%s1 + $0x38] sm:$0xf]
    %v55 = vld [vmem:[%s1 + $0x3c] sm:$0xf]
    %v56 = vld [vmem:[%s2] sm:$0xf]
    %v57 = vld [vmem:[%s2 + $0x4] sm:$0xf]
    %v58 = vld [vmem:[%s2 + $0x8] sm:$0xf]
    %v59 = vld [vmem:[%s2 + $0xc] sm:$0xf]
    %v60 = vld [vmem:[%s2 + $0x10] sm:$0xf]
    %v61 = vld [vmem:[%s2 + $0x14] sm:$0xf]
    %v62 = vld [vmem:[%s2 + $0x18] sm:$0xf]
    %v63 = vld [vmem:[%s2 + $0x1c] sm:$0xf]
    %v64 = vld [vmem:[%s2 + $0x20] sm:$0xf]
    %v65 = vld [vmem:[%s2 + $0x24] sm:$0xf]
    %v66 = vld [vmem:[%s2 + $0x28] sm:$0xf]
    %v67 = vld [vmem:[%s2 + $0x2c] sm:$0xf]
    %v68 = vld [vmem:[%s2 + $0x30] sm:$0xf]
    %v69 = vld [vmem:[%s2 + $0x34] sm:$0xf]
    %v70 = vld [vmem:[%s2 + $0x38] sm:$0xf]
    %v71 = vld [vmem:[%s2 + $0x3c] sm:$0xf]
    %v88 = vunpack.c.l.b16 %v40
    %v89 = vunpack.c.l.b16 %v41
    %v90 = vunpack.c.l.b16 %v42
    %v91 = vunpack.c.l.b16 %v43
    %v92 = vunpack.c.l.b16 %v44
    %v93 = vunpack.c.l.b16 %v45
    %v94 = vunpack.c.l.b16 %v46
    %v95 = vunpack.c.l.b16 %v47
    %v96 = vunpack.c.l.b16 %v48
    %v97 = vunpack.c.l.b16 %v49
    %v98 = vunpack.c.l.b16 %v50
    %v99 = vunpack.c.l.b16 %v51
    %v100 = vunpack.c.l.b16 %v52
    %v101 = vunpack.c.l.b16 %v53
    %v102 = vunpack.c.l.b16 %v54
    %v103 = vunpack.c.l.b16 %v55
    %v104 = vpack.c.b16 %v89, %v88
    %v105 = vpack.c.b16 %v91, %v90
    %v106 = vpack.c.b16 %v93, %v92
    %v107 = vpack.c.b16 %v95, %v94
    %v108 = vpack.c.b16 %v97, %v96
    %v109 = vpack.c.b16 %v99, %v98
    %v110 = vpack.c.b16 %v101, %v100
    %v111 = vpack.c.b16 %v103, %v102
    %v136 = vunpack.c.l.b16 %v56
    %v137 = vunpack.c.l.b16 %v57
    %v138 = vunpack.c.l.b16 %v58
    %v139 = vunpack.c.l.b16 %v59
    %v140 = vunpack.c.l.b16 %v60
    %v141 = vunpack.c.l.b16 %v61
    %v142 = vunpack.c.l.b16 %v62
    %v143 = vunpack.c.l.b16 %v63
    %v144 = vunpack.c.l.b16 %v64
    %v145 = vunpack.c.l.b16 %v65
    %v146 = vunpack.c.l.b16 %v66
    %v147 = vunpack.c.l.b16 %v67
    %v148 = vunpack.c.l.b16 %v68
    %v149 = vunpack.c.l.b16 %v69
    %v150 = vunpack.c.l.b16 %v70
    %v151 = vunpack.c.l.b16 %v71
    %v152 = vpack.c.b16 %v137, %v136
    %v153 = vpack.c.b16 %v139, %v138
    %v154 = vpack.c.b16 %v141, %v140
    %v155 = vpack.c.b16 %v143, %v142
    %v156 = vpack.c.b16 %v145, %v144
    %v157 = vpack.c.b16 %v147, %v146
    %v158 = vpack.c.b16 %v149, %v148
    %v159 = vpack.c.b16 %v151, %v150
    %168 = vmatprep.subr.bf16.mxu0 0
    %169 = vmatpush1.bf16.msra.mxu0 %v152
    %170 = vmatprep.subr.bf16.mxu0 0
    %171 = vmatpush1.bf16.msra.mxu0 %v153
    %172 = vmatprep.subr.bf16.mxu0 0
    %173 = vmatpush1.bf16.msra.mxu0 %v154
    %174 = vmatprep.subr.bf16.mxu0 0
    %175 = vmatpush1.bf16.msra.mxu0 %v155
    %176 = vmatprep.subr.bf16.mxu0 0
    %177 = vmatpush1.bf16.msra.mxu0 %v156
    %178 = vmatprep.subr.bf16.mxu0 0
    %179 = vmatpush1.bf16.msra.mxu0 %v157
    %180 = vmatprep.subr.bf16.mxu0 0
    %181 = vmatpush1.bf16.msra.mxu0 %v158
    %182 = vmatprep.subr.bf16.mxu0 0
    %183 = vmatpush1.bf16.msra.mxu0 %v159
    %184 = vmatprep.subr.bf16.mxu0 0
    %185 = vmatpush1.bf16.msra.mxu0 0
    %186 = vmatprep.subr.bf16.mxu0 0
    %187 = vmatpush1.bf16.msra.mxu0 0
    %188 = vmatprep.subr.bf16.mxu0 0
    %189 = vmatpush1.bf16.msra.mxu0 0
    %190 = vmatprep.subr.bf16.mxu0 0
    %191 = vmatpush1.bf16.msra.mxu0 0
    %192 = vmatprep.subr.bf16.mxu0 0
    %193 = vmatpush1.bf16.msra.mxu0 0
    %194 = vmatprep.subr.bf16.mxu0 0
    %195 = vmatpush1.bf16.msra.mxu0 0
    %196 = vmatprep.subr.bf16.mxu0 0
    %197 = vmatpush1.bf16.msra.mxu0 0
    %198 = vmatprep.subr.bf16.mxu0 0
    %199 = vmatpush1.bf16.msra.mxu0 0
    %200 = vmatprep.mubr.bf16.mxu0 0
    %201 = vmatmul.mubr.bf16.gmra.mrb[0].mxu0 %v104
    %v202 = vpop.f32.mrb[0].mxu0
    %v203 = vadd.f32 0.0, %v202
    %v204 = vpop.f32.mrb[0].mxu0
    %v205 = vpop.f32.mrb[0].mxu0
    %v206 = vadd.f32 0.0, %v205
    %v207 = vpop.f32.mrb[0].mxu0
    %208 = vmatprep.mubr.bf16.mxu0 0
    %209 = vmatmul.mubr.bf16.gmra.mrb[0].mxu0 %v105
    %v210 = vpop.f32.mrb[0].mxu0
    %v211 = vadd.f32 0.0, %v210
    %v212 = vpop.f32.mrb[0].mxu0
    %v213 = vpop.f32.mrb[0].mxu0
    %v214 = vadd.f32 0.0, %v213
    %v215 = vpop.f32.mrb[0].mxu0
    %216 = vmatprep.mubr.bf16.mxu0 0
    %217 = vmatmul.mubr.bf16.gmra.mrb[0].mxu0 %v106
    %v218 = vpop.f32.mrb[0].mxu0
    %v219 = vadd.f32 0.0, %v218
    %v220 = vpop.f32.mrb[0].mxu0
    %v221 = vpop.f32.mrb[0].mxu0
    %v222 = vadd.f32 0.0, %v221
    %v223 = vpop.f32.mrb[0].mxu0
    %224 = vmatprep.mubr.bf16.mxu0 0
    %225 = vmatmul.mubr.bf16.gmra.mrb[0].mxu0 %v107
    %v226 = vpop.f32.mrb[0].mxu0
    %v227 = vadd.f32 0.0, %v226
    %v228 = vpop.f32.mrb[0].mxu0
    %v229 = vpop.f32.mrb[0].mxu0
    %v230 = vadd.f32 0.0, %v229
    %v231 = vpop.f32.mrb[0].mxu0
    %232 = vmatprep.mubr.bf16.mxu0 0
    %233 = vmatmul.mubr.bf16.gmra.mrb[0].mxu0 %v108
    %v234 = vpop.f32.mrb[0].mxu0
    %v235 = vadd.f32 0.0, %v234
    %v236 = vpop.f32.mrb[0].mxu0
    %v237 = vpop.f32.mrb[0].mxu0
    %v238 = vadd.f32 0.0, %v237
    %v239 = vpop.f32.mrb[0].mxu0
    %240 = vmatprep.mubr.bf16.mxu0 0
    %241 = vmatmul.mubr.bf16.gmra.mrb[0].mxu0 %v109
    %v242 = vpop.f32.mrb[0].mxu0
    %v243 = vadd.f32 0.0, %v242
    %v244 = vpop.f32.mrb[0].mxu0
    %v245 = vpop.f32.mrb[0].mxu0
    %v246 = vadd.f32 0.0, %v245
    %v247 = vpop.f32.mrb[0].mxu0
    %248 = vmatprep.mubr.bf16.mxu0 0
    %249 = vmatmul.mubr.bf16.gmra.mrb[0].mxu0 %v110
    %v250 = vpop.f32.mrb[0].mxu0
    %v251 = vadd.f32 0.0, %v250
    %v252 = vpop.f32.mrb[0].mxu0
    %v253 = vpop.f32.mrb[0].mxu0
    %v254 = vadd.f32 0.0, %v253
    %v255 = vpop.f32.mrb[0].mxu0
    %256 = vmatprep.mubr.bf16.mxu0 0
    %257 = vmatmul.mubr.bf16.gmra.mrb[0].mxu0 %v111
    %v258 = vpop.f32.mrb[0].mxu0
    %v259 = vadd.f32 0.0, %v258
    %v260 = vpop.f32.mrb[0].mxu0
    %v261 = vpop.f32.mrb[0].mxu0
    %v262 = vadd.f32 0.0, %v261
    %v263 = vpop.f32.mrb[0].mxu0
    %264 = vdwg.mxu0
    %v265 = vld [vmem:[%s0] sm:$0xf]
    %v266 = vld [vmem:[%s0 + $0x4] sm:$0xf]
    %v267 = vld [vmem:[%s0 + $0x8] sm:$0xf]
    %v268 = vld [vmem:[%s0 + $0xc] sm:$0xf]
    %v269 = vld [vmem:[%s0 + $0x10] sm:$0xf]
    %v270 = vld [vmem:[%s0 + $0x14] sm:$0xf]
    %v271 = vld [vmem:[%s0 + $0x18] sm:$0xf]
    %v272 = vld [vmem:[%s0 + $0x1c] sm:$0xf]
    %v273 = vld [vmem:[%s0 + $0x20] sm:$0xf]
    %v274 = vld [vmem:[%s0 + $0x24] sm:$0xf]
    %v275 = vld [vmem:[%s0 + $0x28] sm:$0xf]
    %v276 = vld [vmem:[%s0 + $0x2c] sm:$0xf]
    %v277 = vld [vmem:[%s0 + $0x30] sm:$0xf]
    %v278 = vld [vmem:[%s0 + $0x34] sm:$0xf]
    %v279 = vld [vmem:[%s0 + $0x38] sm:$0xf]
    %v280 = vld [vmem:[%s0 + $0x3c] sm:$0xf]
    %v281 = vpack.c.bf16 %v206, %v203
    %v282 = vpack.c.bf16 %v214, %v211
    %v283 = vpack.c.bf16 %v222, %v219
    %v284 = vpack.c.bf16 %v230, %v227
    %v285 = vpack.c.bf16 %v238, %v235
    %v286 = vpack.c.bf16 %v246, %v243
    %v287 = vpack.c.bf16 %v254, %v251
    %v288 = vpack.c.bf16 %v262, %v259
    %v289 = vld [vmem:[%s3] sm:$0x1]
    %v291 = vlaneseq
    %v292 = vshrl.u32 %v291, 7
    %v293 = vsub.s32 0, %v292
    %v294 = vrot.slane %v289, %v293
    %v312 = vunpack.c.l.b16 %v265
    %v313 = vunpack.c.l.b16 %v266
    %v314 = vunpack.c.l.b16 %v267
    %v315 = vunpack.c.l.b16 %v268
    %v316 = vunpack.c.l.b16 %v269
    %v317 = vunpack.c.l.b16 %v270
    %v318 = vunpack.c.l.b16 %v271
    %v319 = vunpack.c.l.b16 %v272
    %v320 = vunpack.c.l.b16 %v273
    %v321 = vunpack.c.l.b16 %v274
    %v322 = vunpack.c.l.b16 %v275
    %v323 = vunpack.c.l.b16 %v276
    %v324 = vunpack.c.l.b16 %v277
    %v325 = vunpack.c.l.b16 %v278
    %v326 = vunpack.c.l.b16 %v279
    %v327 = vunpack.c.l.b16 %v280
    %v328 = vpack.c.b16 %v313, %v312
    %v329 = vpack.c.b16 %v315, %v314
    %v330 = vpack.c.b16 %v317, %v316
    %v331 = vpack.c.b16 %v319, %v318
    %v332 = vpack.c.b16 %v321, %v320
    %v333 = vpack.c.b16 %v323, %v322
    %v334 = vpack.c.b16 %v325, %v324
    %v335 = vpack.c.b16 %v327, %v326
    %344 = vmatprep.subr.bf16.mxu0 0
    %345 = vmatpush1.bf16.msra.mxu0 %v281
    %346 = vmatprep.subr.bf16.mxu0 0
    %347 = vmatpush1.bf16.msra.mxu0 %v282
    %348 = vmatprep.subr.bf16.mxu0 0
    %349 = vmatpush1.bf16.msra.mxu0 %v283
    %350 = vmatprep.subr.bf16.mxu0 0
    %351 = vmatpush1.bf16.msra.mxu0 %v284
    %352 = vmatprep.subr.bf16.mxu0 0
    %353 = vmatpush1.bf16.msra.mxu0 %v285
    %354 = vmatprep.subr.bf16.mxu0 0
    %355 = vmatpush1.bf16.msra.mxu0 %v286
    %356 = vmatprep.subr.bf16.mxu0 0
    %357 = vmatpush1.bf16.msra.mxu0 %v287
    %358 = vmatprep.subr.bf16.mxu0 0
    %359 = vmatpush1.bf16.msra.mxu0 %v288
    %360 = vmatprep.subr.bf16.mxu0 0
    %361 = vmatpush1.bf16.msra.mxu0 0
    %362 = vmatprep.subr.bf16.mxu0 0
    %363 = vmatpush1.bf16.msra.mxu0 0
    %364 = vmatprep.subr.bf16.mxu0 0
    %365 = vmatpush1.bf16.msra.mxu0 0
    %366 = vmatprep.subr.bf16.mxu0 0
    %367 = vmatpush1.bf16.msra.mxu0 0
    %368 = vmatprep.subr.bf16.mxu0 0
    %369 = vmatpush1.bf16.msra.mxu0 0
    %370 = vmatprep.subr.bf16.mxu0 0
    %371 = vmatpush1.bf16.msra.mxu0 0
    %372 = vmatprep.subr.bf16.mxu0 0
    %373 = vmatpush1.bf16.msra.mxu0 0
    %374 = vmatprep.subr.bf16.mxu0 0
    %375 = vmatpush1.bf16.msra.mxu0 0
    %376 = vmatprep.mubr.bf16.mxu0 0
    %377 = vmatmul.mubr.bf16.gmra.mrb[0].mxu0 %v328
    %v378 = vpop.f32.mrb[0].mxu0
    %v379 = vadd.f32 %v294, %v378
    %v380 = vpop.f32.mrb[0].mxu0
    %v381 = vpop.f32.mrb[0].mxu0
    %v382 = vadd.f32 %v294, %v381
    %v383 = vpop.f32.mrb[0].mxu0
    %384 = vmatprep.mubr.bf16.mxu0 0
    %385 = vmatmul.mubr.bf16.gmra.mrb[0].mxu0 %v329
    %v386 = vpop.f32.mrb[0].mxu0
    %v387 = vadd.f32 %v294, %v386
    %v388 = vpop.f32.mrb[0].mxu0
    %v389 = vpop.f32.mrb[0].mxu0
    %v390 = vadd.f32 %v294, %v389
    %v391 = vpop.f32.mrb[0].mxu0
    %392 = vmatprep.mubr.bf16.mxu0 0
    %393 = vmatmul.mubr.bf16.gmra.mrb[0].mxu0 %v330
    %v394 = vpop.f32.mrb[0].mxu0
    %v395 = vadd.f32 %v294, %v394
    %v396 = vpop.f32.mrb[0].mxu0
    %v397 = vpop.f32.mrb[0].mxu0
    %v398 = vadd.f32 %v294, %v397
    %v399 = vpop.f32.mrb[0].mxu0
    %400 = vmatprep.mubr.bf16.mxu0 0
    %401 = vmatmul.mubr.bf16.gmra.mrb[0].mxu0 %v331
    %v402 = vpop.f32.mrb[0].mxu0
    %v403 = vadd.f32 %v294, %v402
    %v404 = vpop.f32.mrb[0].mxu0
    %v405 = vpop.f32.mrb[0].mxu0
    %v406 = vadd.f32 %v294, %v405
    %v407 = vpop.f32.mrb[0].mxu0
    %408 = vmatprep.mubr.bf16.mxu0 0
    %409 = vmatmul.mubr.bf16.gmra.mrb[0].mxu0 %v332
    %v410 = vpop.f32.mrb[0].mxu0
    %v411 = vadd.f32 %v294, %v410
    %v412 = vpop.f32.mrb[0].mxu0
    %v413 = vpop.f32.mrb[0].mxu0
    %v414 = vadd.f32 %v294, %v413
    %v415 = vpop.f32.mrb[0].mxu0
    %416 = vmatprep.mubr.bf16.mxu0 0
    %417 = vmatmul.mubr.bf16.gmra.mrb[0].mxu0 %v333
    %v418 = vpop.f32.mrb[0].mxu0
    %v419 = vadd.f32 %v294, %v418
    %v420 = vpop.f32.mrb[0].mxu0
    %v421 = vpop.f32.mrb[0].mxu0
    %v422 = vadd.f32 %v294, %v421
    %v423 = vpop.f32.mrb[0].mxu0
    %424 = vmatprep.mubr.bf16.mxu0 0
    %425 = vmatmul.mubr.bf16.gmra.mrb[0].mxu0 %v334
    %v426 = vpop.f32.mrb[0].mxu0
    %v427 = vadd.f32 %v294, %v426
    %v428 = vpop.f32.mrb[0].mxu0
    %v429 = vpop.f32.mrb[0].mxu0
    %v430 = vadd.f32 %v294, %v429
    %v431 = vpop.f32.mrb[0].mxu0
    %432 = vmatprep.mubr.bf16.mxu0 0
    %433 = vmatmul.mubr.bf16.gmra.mrb[0].mxu0 %v335
    %v434 = vpop.f32.mrb[0].mxu0
    %v435 = vadd.f32 %v294, %v434
    %v436 = vpop.f32.mrb[0].mxu0
    %v437 = vpop.f32.mrb[0].mxu0
    %v438 = vadd.f32 %v294, %v437
    %v439 = vpop.f32.mrb[0].mxu0
    %440 = vdwg.mxu0
    %v441 = vmax.f32 %v379, 0.0
    %v442 = vmax.f32 %v382, 0.0
    %v443 = vmax.f32 %v387, 0.0
    %v444 = vmax.f32 %v390, 0.0
    %v445 = vmax.f32 %v395, 0.0
    %v446 = vmax.f32 %v398, 0.0
    %v447 = vmax.f32 %v403, 0.0
    %v448 = vmax.f32 %v406, 0.0
    %v449 = vmax.f32 %v411, 0.0
    %v450 = vmax.f32 %v414, 0.0
    %v451 = vmax.f32 %v419, 0.0
    %v452 = vmax.f32 %v422, 0.0
    %v453 = vmax.f32 %v427, 0.0
    %v454 = vmax.f32 %v430, 0.0
    %v455 = vmax.f32 %v435, 0.0
    %v456 = vmax.f32 %v438, 0.0
    %v457 = vpack.c.bf16 %v442, %v441
    %v458 = vpack.c.bf16 %v444, %v443
    %v459 = vpack.c.bf16 %v446, %v445
    %v460 = vpack.c.bf16 %v448, %v447
    %v461 = vpack.c.bf16 %v450, %v449
    %v462 = vpack.c.bf16 %v452, %v451
    %v463 = vpack.c.bf16 %v454, %v453
    %v464 = vpack.c.bf16 %v456, %v455
    %v465 = vld [vmem:[%s4] sm:$0xf]
    %v466 = vld [vmem:[%s4 + $0x4] sm:$0xf]
    %v467 = vld [vmem:[%s4 + $0x8] sm:$0xf]
    %v468 = vld [vmem:[%s4 + $0xc] sm:$0xf]
    %v469 = vld [vmem:[%s4 + $0x10] sm:$0xf]
    %v470 = vld [vmem:[%s4 + $0x14] sm:$0xf]
    %v471 = vld [vmem:[%s4 + $0x18] sm:$0xf]
    %v472 = vld [vmem:[%s4 + $0x1c] sm:$0xf]
    %v473 = vld [vmem:[%s4 + $0x20] sm:$0xf]
    %v474 = vld [vmem:[%s4 + $0x24] sm:$0xf]
    %v475 = vld [vmem:[%s4 + $0x28] sm:$0xf]
    %v476 = vld [vmem:[%s4 + $0x2c] sm:$0xf]
    %v477 = vld [vmem:[%s4 + $0x30] sm:$0xf]
    %v478 = vld [vmem:[%s4 + $0x34] sm:$0xf]
    %v479 = vld [vmem:[%s4 + $0x38] sm:$0xf]
    %v480 = vld [vmem:[%s4 + $0x3c] sm:$0xf]
    %v497 = vunpack.c.l.b16 %v465
    %v498 = vunpack.c.l.b16 %v466
    %v499 = vunpack.c.l.b16 %v467
    %v500 = vunpack.c.l.b16 %v468
    %v501 = vunpack.c.l.b16 %v469
    %v502 = vunpack.c.l.b16 %v470
    %v503 = vunpack.c.l.b16 %v471
    %v504 = vunpack.c.l.b16 %v472
    %v505 = vunpack.c.l.b16 %v473
    %v506 = vunpack.c.l.b16 %v474
    %v507 = vunpack.c.l.b16 %v475
    %v508 = vunpack.c.l.b16 %v476
    %v509 = vunpack.c.l.b16 %v477
    %v510 = vunpack.c.l.b16 %v478
    %v511 = vunpack.c.l.b16 %v479
    %v512 = vunpack.c.l.b16 %v480
    %v513 = vpack.c.b16 %v498, %v497
    %v514 = vpack.c.b16 %v500, %v499
    %v515 = vpack.c.b16 %v502, %v501
    %v516 = vpack.c.b16 %v504, %v503
    %v517 = vpack.c.b16 %v506, %v505
    %v518 = vpack.c.b16 %v508, %v507
    %v519 = vpack.c.b16 %v510, %v509
    %v520 = vpack.c.b16 %v512, %v511
    %529 = vmatprep.subr.bf16.mxu0 0
    %530 = vmatpush1.bf16.msra.mxu0 %v513
    %531 = vmatprep.subr.bf16.mxu0 0
    %532 = vmatpush1.bf16.msra.mxu0 %v514
    %533 = vmatprep.subr.bf16.mxu0 0
    %534 = vmatpush1.bf16.msra.mxu0 %v515
    %535 = vmatprep.subr.bf16.mxu0 0
    %536 = vmatpush1.bf16.msra.mxu0 %v516
    %537 = vmatprep.subr.bf16.mxu0 0
    %538 = vmatpush1.bf16.msra.mxu0 %v517
    %539 = vmatprep.subr.bf16.mxu0 0
    %540 = vmatpush1.bf16.msra.mxu0 %v518
    %541 = vmatprep.subr.bf16.mxu0 0
    %542 = vmatpush1.bf16.msra.mxu0 %v519
    %543 = vmatprep.subr.bf16.mxu0 0
    %544 = vmatpush1.bf16.msra.mxu0 %v520
    %545 = vmatprep.subr.bf16.mxu0 0
    %546 = vmatpush1.bf16.msra.mxu0 0
    %547 = vmatprep.subr.bf16.mxu0 0
    %548 = vmatpush1.bf16.msra.mxu0 0
    %549 = vmatprep.subr.bf16.mxu0 0
    %550 = vmatpush1.bf16.msra.mxu0 0
    %551 = vmatprep.subr.bf16.mxu0 0
    %552 = vmatpush1.bf16.msra.mxu0 0
    %553 = vmatprep.subr.bf16.mxu0 0
    %554 = vmatpush1.bf16.msra.mxu0 0
    %555 = vmatprep.subr.bf16.mxu0 0
    %556 = vmatpush1.bf16.msra.mxu0 0
    %557 = vmatprep.subr.bf16.mxu0 0
    %558 = vmatpush1.bf16.msra.mxu0 0
    %559 = vmatprep.subr.bf16.mxu0 0
    %560 = vmatpush1.bf16.msra.mxu0 0
    %561 = vmatprep.mubr.bf16.mxu0 0
    %562 = vmatmul.mubr.bf16.gmra.mrb[0].mxu0 %v457
    %v563 = vpop.f32.mrb[0].mxu0
    %v564 = vadd.f32 0.0, %v563
    %v565 = vpop.f32.mrb[0].mxu0
    %v566 = vpop.f32.mrb[0].mxu0
    %v567 = vadd.f32 0.0, %v566
    %v568 = vpop.f32.mrb[0].mxu0
    %569 = vmatprep.mubr.bf16.mxu0 0
    %570 = vmatmul.mubr.bf16.gmra.mrb[0].mxu0 %v458
    %v571 = vpop.f32.mrb[0].mxu0
    %v572 = vadd.f32 0.0, %v571
    %v573 = vpop.f32.mrb[0].mxu0
    %v574 = vpop.f32.mrb[0].mxu0
    %v575 = vadd.f32 0.0, %v574
    %v576 = vpop.f32.mrb[0].mxu0
    %577 = vmatprep.mubr.bf16.mxu0 0
    %578 = vmatmul.mubr.bf16.gmra.mrb[0].mxu0 %v459
    %v579 = vpop.f32.mrb[0].mxu0
    %v580 = vadd.f32 0.0, %v579
    %v581 = vpop.f32.mrb[0].mxu0
    %v582 = vpop.f32.mrb[0].mxu0
    %v583 = vadd.f32 0.0, %v582
    %v584 = vpop.f32.mrb[0].mxu0
    %585 = vmatprep.mubr.bf16.mxu0 0
    %586 = vmatmul.mubr.bf16.gmra.mrb[0].mxu0 %v460
    %v587 = vpop.f32.mrb[0].mxu0
    %v588 = vadd.f32 0.0, %v587
    %v589 = vpop.f32.mrb[0].mxu0
    %v590 = vpop.f32.mrb[0].mxu0
    %v591 = vadd.f32 0.0, %v590
    %v592 = vpop.f32.mrb[0].mxu0
    %593 = vmatprep.mubr.bf16.mxu0 0
    %594 = vmatmul.mubr.bf16.gmra.mrb[0].mxu0 %v461
    %v595 = vpop.f32.mrb[0].mxu0
    %v596 = vadd.f32 0.0, %v595
    %v597 = vpop.f32.mrb[0].mxu0
    %v598 = vpop.f32.mrb[0].mxu0
    %v599 = vadd.f32 0.0, %v598
    %v600 = vpop.f32.mrb[0].mxu0
    %601 = vmatprep.mubr.bf16.mxu0 0
    %602 = vmatmul.mubr.bf16.gmra.mrb[0].mxu0 %v462
    %v603 = vpop.f32.mrb[0].mxu0
    %v604 = vadd.f32 0.0, %v603
    %v605 = vpop.f32.mrb[0].mxu0
    %v606 = vpop.f32.mrb[0].mxu0
    %v607 = vadd.f32 0.0, %v606
    %v608 = vpop.f32.mrb[0].mxu0
    %609 = vmatprep.mubr.bf16.mxu0 0
    %610 = vmatmul.mubr.bf16.gmra.mrb[0].mxu0 %v463
    %v611 = vpop.f32.mrb[0].mxu0
    %v612 = vadd.f32 0.0, %v611
    %v613 = vpop.f32.mrb[0].mxu0
    %v614 = vpop.f32.mrb[0].mxu0
    %v615 = vadd.f32 0.0, %v614
    %v616 = vpop.f32.mrb[0].mxu0
    %617 = vmatprep.mubr.bf16.mxu0 0
    %618 = vmatmul.mubr.bf16.gmra.mrb[0].mxu0 %v464
    %v619 = vpop.f32.mrb[0].mxu0
    %v620 = vadd.f32 0.0, %v619
    %v621 = vpop.f32.mrb[0].mxu0
    %v622 = vpop.f32.mrb[0].mxu0
    %v623 = vadd.f32 0.0, %v622
    %v624 = vpop.f32.mrb[0].mxu0
    %625 = vdwg.mxu0
    %v626 = vpack.c.bf16 %v567, %v564
    %v627 = vpack.c.bf16 %v575, %v572
    %v628 = vpack.c.bf16 %v583, %v580
    %v629 = vpack.c.bf16 %v591, %v588
    %v630 = vpack.c.bf16 %v599, %v596
    %v631 = vpack.c.bf16 %v607, %v604
    %v632 = vpack.c.bf16 %v615, %v612
    %v633 = vpack.c.bf16 %v623, %v620
    %v634 = vld [vmem:[%s5] sm:$0x1]
    %v636 = vlaneseq
    %v637 = vshrl.u32 %v636, 7
    %v638 = vsub.s32 0, %v637
    %v639 = vrot.slane %v634, %v638
    %641 = vmatprep.subr.bf16.mxu0 0
    %642 = vmatpush1.bf16.msra.mxu0 %v626
    %643 = vmatprep.subr.bf16.mxu0 0
    %644 = vmatpush1.bf16.msra.mxu0 %v627
    %645 = vmatprep.subr.bf16.mxu0 0
    %646 = vmatpush1.bf16.msra.mxu0 %v628
    %647 = vmatprep.subr.bf16.mxu0 0
    %648 = vmatpush1.bf16.msra.mxu0 %v629
    %649 = vmatprep.subr.bf16.mxu0 0
    %650 = vmatpush1.bf16.msra.mxu0 %v630
    %651 = vmatprep.subr.bf16.mxu0 0
    %652 = vmatpush1.bf16.msra.mxu0 %v631
    %653 = vmatprep.subr.bf16.mxu0 0
    %654 = vmatpush1.bf16.msra.mxu0 %v632
    %655 = vmatprep.subr.bf16.mxu0 0
    %656 = vmatpush1.bf16.msra.mxu0 %v633
    %657 = vmatprep.subr.bf16.mxu0 0
    %658 = vmatpush1.bf16.msra.mxu0 0
    %659 = vmatprep.subr.bf16.mxu0 0
    %660 = vmatpush1.bf16.msra.mxu0 0
    %661 = vmatprep.subr.bf16.mxu0 0
    %662 = vmatpush1.bf16.msra.mxu0 0
    %663 = vmatprep.subr.bf16.mxu0 0
    %664 = vmatpush1.bf16.msra.mxu0 0
    %665 = vmatprep.subr.bf16.mxu0 0
    %666 = vmatpush1.bf16.msra.mxu0 0
    %667 = vmatprep.subr.bf16.mxu0 0
    %668 = vmatpush1.bf16.msra.mxu0 0
    %669 = vmatprep.subr.bf16.mxu0 0
    %670 = vmatpush1.bf16.msra.mxu0 0
    %671 = vmatprep.subr.bf16.mxu0 0
    %672 = vmatpush1.bf16.msra.mxu0 0
    %673 = vmatprep.mubr.bf16.mxu0 0
    %674 = vmatmul.mubr.bf16.gmra.mrb[0].mxu0 %v328
    %v675 = vpop.f32.mrb[0].mxu0
    %v676 = vadd.f32 %v639, %v675
    %v677 = vpop.f32.mrb[0].mxu0
    %v678 = vpop.f32.mrb[0].mxu0
    %v679 = vadd.f32 %v639, %v678
    %v680 = vpop.f32.mrb[0].mxu0
    %681 = vmatprep.mubr.bf16.mxu0 0
    %682 = vmatmul.mubr.bf16.gmra.mrb[0].mxu0 %v329
    %v683 = vpop.f32.mrb[0].mxu0
    %v684 = vadd.f32 %v639, %v683
    %v685 = vpop.f32.mrb[0].mxu0
    %v686 = vpop.f32.mrb[0].mxu0
    %v687 = vadd.f32 %v639, %v686
    %v688 = vpop.f32.mrb[0].mxu0
    %689 = vmatprep.mubr.bf16.mxu0 0
    %690 = vmatmul.mubr.bf16.gmra.mrb[0].mxu0 %v330
    %v691 = vpop.f32.mrb[0].mxu0
    %v692 = vadd.f32 %v639, %v691
    %v693 = vpop.f32.mrb[0].mxu0
    %v694 = vpop.f32.mrb[0].mxu0
    %v695 = vadd.f32 %v639, %v694
    %v696 = vpop.f32.mrb[0].mxu0
    %697 = vmatprep.mubr.bf16.mxu0 0
    %698 = vmatmul.mubr.bf16.gmra.mrb[0].mxu0 %v331
    %v699 = vpop.f32.mrb[0].mxu0
    %v700 = vadd.f32 %v639, %v699
    %v701 = vpop.f32.mrb[0].mxu0
    %v702 = vpop.f32.mrb[0].mxu0
    %v703 = vadd.f32 %v639, %v702
    %v704 = vpop.f32.mrb[0].mxu0
    %705 = vmatprep.mubr.bf16.mxu0 0
    %706 = vmatmul.mubr.bf16.gmra.mrb[0].mxu0 %v332
    %v707 = vpop.f32.mrb[0].mxu0
    %v708 = vadd.f32 %v639, %v707
    %v709 = vpop.f32.mrb[0].mxu0
    %v710 = vpop.f32.mrb[0].mxu0
    %v711 = vadd.f32 %v639, %v710
    %v712 = vpop.f32.mrb[0].mxu0
    %713 = vmatprep.mubr.bf16.mxu0 0
    %714 = vmatmul.mubr.bf16.gmra.mrb[0].mxu0 %v333
    %v715 = vpop.f32.mrb[0].mxu0
    %v716 = vadd.f32 %v639, %v715
    %v717 = vpop.f32.mrb[0].mxu0
    %v718 = vpop.f32.mrb[0].mxu0
    %v719 = vadd.f32 %v639, %v718
    %v720 = vpop.f32.mrb[0].mxu0
    %721 = vmatprep.mubr.bf16.mxu0 0
    %722 = vmatmul.mubr.bf16.gmra.mrb[0].mxu0 %v334
    %v723 = vpop.f32.mrb[0].mxu0
    %v724 = vadd.f32 %v639, %v723
    %v725 = vpop.f32.mrb[0].mxu0
    %v726 = vpop.f32.mrb[0].mxu0
    %v727 = vadd.f32 %v639, %v726
    %v728 = vpop.f32.mrb[0].mxu0
    %729 = vmatprep.mubr.bf16.mxu0 0
    %730 = vmatmul.mubr.bf16.gmra.mrb[0].mxu0 %v335
    %v731 = vpop.f32.mrb[0].mxu0
    %v732 = vadd.f32 %v639, %v731
    %v733 = vpop.f32.mrb[0].mxu0
    %v734 = vpop.f32.mrb[0].mxu0
    %v735 = vadd.f32 %v639, %v734
    %v736 = vpop.f32.mrb[0].mxu0
    %737 = vdwg.mxu0
    %v738 = vmax.f32 %v676, 0.0
    %v739 = vmax.f32 %v679, 0.0
    %v740 = vmax.f32 %v684, 0.0
    %v741 = vmax.f32 %v687, 0.0
    %v742 = vmax.f32 %v692, 0.0
    %v743 = vmax.f32 %v695, 0.0
    %v744 = vmax.f32 %v700, 0.0
    %v745 = vmax.f32 %v703, 0.0
    %v746 = vmax.f32 %v708, 0.0
    %v747 = vmax.f32 %v711, 0.0
    %v748 = vmax.f32 %v716, 0.0
    %v749 = vmax.f32 %v719, 0.0
    %v750 = vmax.f32 %v724, 0.0
    %v751 = vmax.f32 %v727, 0.0
    %v752 = vmax.f32 %v732, 0.0
    %v753 = vmax.f32 %v735, 0.0
    %v754 = vpack.c.bf16 %v739, %v738
    %v755 = vpack.c.bf16 %v741, %v740
    %v756 = vpack.c.bf16 %v743, %v742
    %v757 = vpack.c.bf16 %v745, %v744
    %v758 = vpack.c.bf16 %v747, %v746
    %v759 = vpack.c.bf16 %v749, %v748
    %v760 = vpack.c.bf16 %v751, %v750
    %v761 = vpack.c.bf16 %v753, %v752
    %v762 = vld [vmem:[%s6] sm:$0xf]
    %v763 = vld [vmem:[%s6 + $0x4] sm:$0xf]
    %v764 = vld [vmem:[%s6 + $0x8] sm:$0xf]
    %v765 = vld [vmem:[%s6 + $0xc] sm:$0xf]
    %v766 = vld [vmem:[%s6 + $0x10] sm:$0xf]
    %v767 = vld [vmem:[%s6 + $0x14] sm:$0xf]
    %v768 = vld [vmem:[%s6 + $0x18] sm:$0xf]
    %v769 = vld [vmem:[%s6 + $0x1c] sm:$0xf]
    %v770 = vld [vmem:[%s6 + $0x20] sm:$0xf]
    %v771 = vld [vmem:[%s6 + $0x24] sm:$0xf]
    %v772 = vld [vmem:[%s6 + $0x28] sm:$0xf]
    %v773 = vld [vmem:[%s6 + $0x2c] sm:$0xf]
    %v774 = vld [vmem:[%s6 + $0x30] sm:$0xf]
    %v775 = vld [vmem:[%s6 + $0x34] sm:$0xf]
    %v776 = vld [vmem:[%s6 + $0x38] sm:$0xf]
    %v777 = vld [vmem:[%s6 + $0x3c] sm:$0xf]
    %v794 = vunpack.c.l.b16 %v762
    %v795 = vunpack.c.l.b16 %v763
    %v796 = vunpack.c.l.b16 %v764
    %v797 = vunpack.c.l.b16 %v765
    %v798 = vunpack.c.l.b16 %v766
    %v799 = vunpack.c.l.b16 %v767
    %v800 = vunpack.c.l.b16 %v768
    %v801 = vunpack.c.l.b16 %v769
    %v802 = vunpack.c.l.b16 %v770
    %v803 = vunpack.c.l.b16 %v771
    %v804 = vunpack.c.l.b16 %v772
    %v805 = vunpack.c.l.b16 %v773
    %v806 = vunpack.c.l.b16 %v774
    %v807 = vunpack.c.l.b16 %v775
    %v808 = vunpack.c.l.b16 %v776
    %v809 = vunpack.c.l.b16 %v777
    %v810 = vpack.c.b16 %v795, %v794
    %v811 = vpack.c.b16 %v797, %v796
    %v812 = vpack.c.b16 %v799, %v798
    %v813 = vpack.c.b16 %v801, %v800
    %v814 = vpack.c.b16 %v803, %v802
    %v815 = vpack.c.b16 %v805, %v804
    %v816 = vpack.c.b16 %v807, %v806
    %v817 = vpack.c.b16 %v809, %v808
    %826 = vmatprep.subr.bf16.mxu0 0
    %827 = vmatpush1.bf16.xpose.msra.mxu0 %v810
    %828 = vmatprep.subr.bf16.mxu0 0
    %829 = vmatpush1.bf16.xpose.msra.mxu0 %v811
    %830 = vmatprep.subr.bf16.mxu0 0
    %831 = vmatpush1.bf16.xpose.msra.mxu0 %v812
    %832 = vmatprep.subr.bf16.mxu0 0
    %833 = vmatpush1.bf16.xpose.msra.mxu0 %v813
    %834 = vmatprep.subr.bf16.mxu0 0
    %835 = vmatpush1.bf16.xpose.msra.mxu0 %v814
    %836 = vmatprep.subr.bf16.mxu0 0
    %837 = vmatpush1.bf16.xpose.msra.mxu0 %v815
    %838 = vmatprep.subr.bf16.mxu0 0
    %839 = vmatpush1.bf16.xpose.msra.mxu0 %v816
    %840 = vmatprep.subr.bf16.mxu0 0
    %841 = vmatpush1.bf16.xpose.msra.mxu0 %v817
    %842 = vmatprep.subr.bf16.mxu0 0
    %843 = vmatpush1.bf16.xpose.msra.mxu0 0
    %844 = vmatprep.subr.bf16.mxu0 0
    %845 = vmatpush1.bf16.xpose.msra.mxu0 0
    %846 = vmatprep.subr.bf16.mxu0 0
    %847 = vmatpush1.bf16.xpose.msra.mxu0 0
    %848 = vmatprep.subr.bf16.mxu0 0
    %849 = vmatpush1.bf16.xpose.msra.mxu0 0
    %850 = vmatprep.subr.bf16.mxu0 0
    %851 = vmatpush1.bf16.xpose.msra.mxu0 0
    %852 = vmatprep.subr.bf16.mxu0 0
    %853 = vmatpush1.bf16.xpose.msra.mxu0 0
    %854 = vmatprep.subr.bf16.mxu0 0
    %855 = vmatpush1.bf16.xpose.msra.mxu0 0
    %856 = vmatprep.subr.bf16.mxu0 0
    %857 = vmatpush1.bf16.xpose.msra.mxu0 0
    %858 = vmatprep.mubr.bf16.mxu0 0
    %859 = vmatmul.mubr.bf16.gmra.mrb[0].mxu0 %v754
    %v860 = vpop.f32.mrb[0].mxu0
    %v861 = vadd.f32 0.0, %v860
    %v862 = vpop.f32.mrb[0].mxu0
    %v863 = vpop.f32.mrb[0].mxu0
    %v864 = vadd.f32 0.0, %v863
    %v865 = vpop.f32.mrb[0].mxu0
    %866 = vmatprep.mubr.bf16.mxu0 0
    %867 = vmatmul.mubr.bf16.gmra.mrb[0].mxu0 %v755
    %v868 = vpop.f32.mrb[0].mxu0
    %v869 = vadd.f32 0.0, %v868
    %v870 = vpop.f32.mrb[0].mxu0
    %v871 = vpop.f32.mrb[0].mxu0
    %v872 = vadd.f32 0.0, %v871
    %v873 = vpop.f32.mrb[0].mxu0
    %874 = vmatprep.mubr.bf16.mxu0 0
    %875 = vmatmul.mubr.bf16.gmra.mrb[0].mxu0 %v756
    %v876 = vpop.f32.mrb[0].mxu0
    %v877 = vadd.f32 0.0, %v876
    %v878 = vpop.f32.mrb[0].mxu0
    %v879 = vpop.f32.mrb[0].mxu0
    %v880 = vadd.f32 0.0, %v879
    %v881 = vpop.f32.mrb[0].mxu0
    %882 = vmatprep.mubr.bf16.mxu0 0
    %883 = vmatmul.mubr.bf16.gmra.mrb[0].mxu0 %v757
    %v884 = vpop.f32.mrb[0].mxu0
    %v885 = vadd.f32 0.0, %v884
    %v886 = vpop.f32.mrb[0].mxu0
    %v887 = vpop.f32.mrb[0].mxu0
    %v888 = vadd.f32 0.0, %v887
    %v889 = vpop.f32.mrb[0].mxu0
    %890 = vmatprep.mubr.bf16.mxu0 0
    %891 = vmatmul.mubr.bf16.gmra.mrb[0].mxu0 %v758
    %v892 = vpop.f32.mrb[0].mxu0
    %v893 = vadd.f32 0.0, %v892
    %v894 = vpop.f32.mrb[0].mxu0
    %v895 = vpop.f32.mrb[0].mxu0
    %v896 = vadd.f32 0.0, %v895
    %v897 = vpop.f32.mrb[0].mxu0
    %898 = vmatprep.mubr.bf16.mxu0 0
    %899 = vmatmul.mubr.bf16.gmra.mrb[0].mxu0 %v759
    %v900 = vpop.f32.mrb[0].mxu0
    %v901 = vadd.f32 0.0, %v900
    %v902 = vpop.f32.mrb[0].mxu0
    %v903 = vpop.f32.mrb[0].mxu0
    %v904 = vadd.f32 0.0, %v903
    %v905 = vpop.f32.mrb[0].mxu0
    %906 = vmatprep.mubr.bf16.mxu0 0
    %907 = vmatmul.mubr.bf16.gmra.mrb[0].mxu0 %v760
    %v908 = vpop.f32.mrb[0].mxu0
    %v909 = vadd.f32 0.0, %v908
    %v910 = vpop.f32.mrb[0].mxu0
    %v911 = vpop.f32.mrb[0].mxu0
    %v912 = vadd.f32 0.0, %v911
    %v913 = vpop.f32.mrb[0].mxu0
    %914 = vmatprep.mubr.bf16.mxu0 0
    %915 = vmatmul.mubr.bf16.gmra.mrb[0].mxu0 %v761
    %v916 = vpop.f32.mrb[0].mxu0
    %v917 = vadd.f32 0.0, %v916
    %v918 = vpop.f32.mrb[0].mxu0
    %v919 = vpop.f32.mrb[0].mxu0
    %v920 = vadd.f32 0.0, %v919
    %v921 = vpop.f32.mrb[0].mxu0
    %922 = vdwg.mxu0
    %v923 = vlaneseq
    %v924 = vshrl.u32 %v923, 7
    %v925 = vadd.s32 %v924, 8
    %v926 = vadd.s32 %v924, 16
    %v927 = vadd.s32 %v924, 24
    %v928 = vadd.s32 %v924, 32
    %v929 = vadd.s32 %v924, 40
    %v930 = vadd.s32 %v924, 48
    %v931 = vadd.s32 %v924, 56
    %v932 = vadd.s32 %v924, 64
    %v933 = vadd.s32 %v924, 72
    %v934 = vadd.s32 %v924, 80
    %v935 = vadd.s32 %v924, 88
    %v936 = vadd.s32 %v924, 96
    %v937 = vadd.s32 %v924, 104
    %v938 = vadd.s32 %v924, 112
    %v939 = vadd.s32 %v924, 120
    %v940 = vld [vmem:[%s9] sm:$0x1]
    %v941 = vlaneseq
    %v942 = vshrl.u32 %v941, 7
    %v943 = vsub.s32 0, %v942
    %v944 = vrot.slane %v940, %v943
    %vm945 = vcmp.eq.s32.totalorder %v924, %v944
    %vm946 = vcmp.eq.s32.totalorder %v925, %v944
    %vm947 = vcmp.eq.s32.totalorder %v926, %v944
    %vm948 = vcmp.eq.s32.totalorder %v927, %v944
    %vm949 = vcmp.eq.s32.totalorder %v928, %v944
    %vm950 = vcmp.eq.s32.totalorder %v929, %v944
    %vm951 = vcmp.eq.s32.totalorder %v930, %v944
    %vm952 = vcmp.eq.s32.totalorder %v931, %v944
    %vm953 = vcmp.eq.s32.totalorder %v932, %v944
    %vm954 = vcmp.eq.s32.totalorder %v933, %v944
    %vm955 = vcmp.eq.s32.totalorder %v934, %v944
    %vm956 = vcmp.eq.s32.totalorder %v935, %v944
    %vm957 = vcmp.eq.s32.totalorder %v936, %v944
    %vm958 = vcmp.eq.s32.totalorder %v937, %v944
    %vm959 = vcmp.eq.s32.totalorder %v938, %v944
    %vm960 = vcmp.eq.s32.totalorder %v939, %v944
    %v961 = vsel %vm945, 1, 0
    %v962 = vsel %vm946, 1, 0
    %v963 = vsel %vm947, 1, 0
    %v964 = vsel %vm948, 1, 0
    %v965 = vsel %vm949, 1, 0
    %v966 = vsel %vm950, 1, 0
    %v967 = vsel %vm951, 1, 0
    %v968 = vsel %vm952, 1, 0
    %v969 = vsel %vm953, 1, 0
    %v970 = vsel %vm954, 1, 0
    %v971 = vsel %vm955, 1, 0
    %v972 = vsel %vm956, 1, 0
    %v973 = vsel %vm957, 1, 0
    %v974 = vsel %vm958, 1, 0
    %v975 = vsel %vm959, 1, 0
    %v976 = vsel %vm960, 1, 0
    %v977 = vcvt.s32.f32 %v961
    %v978 = vcvt.s32.f32 %v962
    %v979 = vcvt.s32.f32 %v963
    %v980 = vcvt.s32.f32 %v964
    %v981 = vcvt.s32.f32 %v965
    %v982 = vcvt.s32.f32 %v966
    %v983 = vcvt.s32.f32 %v967
    %v984 = vcvt.s32.f32 %v968
    %v985 = vcvt.s32.f32 %v969
    %v986 = vcvt.s32.f32 %v970
    %v987 = vcvt.s32.f32 %v971
    %v988 = vcvt.s32.f32 %v972
    %v989 = vcvt.s32.f32 %v973
    %v990 = vcvt.s32.f32 %v974
    %v991 = vcvt.s32.f32 %v975
    %v992 = vcvt.s32.f32 %v976
    %993 = vadd.xlane.f32.xlu0 %v977
    %v994 = vpop.xlane.xlu0 %993
    %995 = vadd.xlane.f32.xlu0 %v978
    %v996 = vpop.xlane.xlu0 %995
    %997 = vadd.xlane.f32.xlu0 %v979
    %v998 = vpop.xlane.xlu0 %997
    %999 = vadd.xlane.f32.xlu0 %v980
    %v1000 = vpop.xlane.xlu0 %999
    %1001 = vadd.xlane.f32.xlu0 %v981
    %v1002 = vpop.xlane.xlu0 %1001
    %1003 = vadd.xlane.f32.xlu0 %v982
    %v1004 = vpop.xlane.xlu0 %1003
    %1005 = vadd.xlane.f32.xlu0 %v983
    %v1006 = vpop.xlane.xlu0 %1005
    %1007 = vadd.xlane.f32.xlu0 %v984
    %v1008 = vpop.xlane.xlu0 %1007
    %1009 = vadd.xlane.f32.xlu0 %v985
    %v1010 = vpop.xlane.xlu0 %1009
    %1011 = vadd.xlane.f32.xlu0 %v986
    %v1012 = vpop.xlane.xlu0 %1011
    %1013 = vadd.xlane.f32.xlu0 %v987
    %v1014 = vpop.xlane.xlu0 %1013
    %1015 = vadd.xlane.f32.xlu0 %v988
    %v1016 = vpop.xlane.xlu0 %1015
    %1017 = vadd.xlane.f32.xlu0 %v989
    %v1018 = vpop.xlane.xlu0 %1017
    %1019 = vadd.xlane.f32.xlu0 %v990
    %v1020 = vpop.xlane.xlu0 %1019
    %1021 = vadd.xlane.f32.xlu0 %v991
    %v1022 = vpop.xlane.xlu0 %1021
    %1023 = vadd.xlane.f32.xlu0 %v992
    %v1024 = vpop.xlane.xlu0 %1023
    %v1025 = vsub.f32 1.0, %v994
    %v1026 = vsub.f32 1.0, %v996
    %v1027 = vsub.f32 1.0, %v998
    %v1028 = vsub.f32 1.0, %v1000
    %v1029 = vsub.f32 1.0, %v1002
    %v1030 = vsub.f32 1.0, %v1004
    %v1031 = vsub.f32 1.0, %v1006
    %v1032 = vsub.f32 1.0, %v1008
    %v1033 = vsub.f32 1.0, %v1010
    %v1034 = vsub.f32 1.0, %v1012
    %v1035 = vsub.f32 1.0, %v1014
    %v1036 = vsub.f32 1.0, %v1016
    %v1037 = vsub.f32 1.0, %v1018
    %v1038 = vsub.f32 1.0, %v1020
    %v1039 = vsub.f32 1.0, %v1022
    %v1040 = vsub.f32 1.0, %v1024
    %v1041 = vmul.f32 %v861, %v1025
    %v1042 = vmul.f32 %v864, %v1026
    %v1043 = vmul.f32 %v869, %v1027
    %v1044 = vmul.f32 %v872, %v1028
    %v1045 = vmul.f32 %v877, %v1029
    %v1046 = vmul.f32 %v880, %v1030
    %v1047 = vmul.f32 %v885, %v1031
    %v1048 = vmul.f32 %v888, %v1032
    %v1049 = vmul.f32 %v893, %v1033
    %v1050 = vmul.f32 %v896, %v1034
    %v1051 = vmul.f32 %v901, %v1035
    %v1052 = vmul.f32 %v904, %v1036
    %v1053 = vmul.f32 %v909, %v1037
    %v1054 = vmul.f32 %v912, %v1038
    %v1055 = vmul.f32 %v917, %v1039
    %v1056 = vmul.f32 %v920, %v1040
    %v1057 = vpack.c.bf16 %v1042, %v1041
    %v1058 = vpack.c.bf16 %v1044, %v1043
    %v1059 = vpack.c.bf16 %v1046, %v1045
    %v1060 = vpack.c.bf16 %v1048, %v1047
    %v1061 = vpack.c.bf16 %v1050, %v1049
    %v1062 = vpack.c.bf16 %v1052, %v1051
    %v1063 = vpack.c.bf16 %v1054, %v1053
    %v1064 = vpack.c.bf16 %v1056, %v1055
    %v1065 = vld [vmem:[%s7] sm:$0xf]
    %v1066 = vld [vmem:[%s7 + $0x4] sm:$0xf]
    %v1067 = vld [vmem:[%s7 + $0x8] sm:$0xf]
    %v1068 = vld [vmem:[%s7 + $0xc] sm:$0xf]
    %v1069 = vld [vmem:[%s7 + $0x10] sm:$0xf]
    %v1070 = vld [vmem:[%s7 + $0x14] sm:$0xf]
    %v1071 = vld [vmem:[%s7 + $0x18] sm:$0xf]
    %v1072 = vld [vmem:[%s7 + $0x1c] sm:$0xf]
    %v1073 = vld [vmem:[%s7 + $0x20] sm:$0xf]
    %v1074 = vld [vmem:[%s7 + $0x24] sm:$0xf]
    %v1075 = vld [vmem:[%s7 + $0x28] sm:$0xf]
    %v1076 = vld [vmem:[%s7 + $0x2c] sm:$0xf]
    %v1077 = vld [vmem:[%s7 + $0x30] sm:$0xf]
    %v1078 = vld [vmem:[%s7 + $0x34] sm:$0xf]
    %v1079 = vld [vmem:[%s7 + $0x38] sm:$0xf]
    %v1080 = vld [vmem:[%s7 + $0x3c] sm:$0xf]
    %v1097 = vunpack.c.l.b16 %v1065
    %v1098 = vunpack.c.l.b16 %v1066
    %v1099 = vunpack.c.l.b16 %v1067
    %v1100 = vunpack.c.l.b16 %v1068
    %v1101 = vunpack.c.l.b16 %v1069
    %v1102 = vunpack.c.l.b16 %v1070
    %v1103 = vunpack.c.l.b16 %v1071
    %v1104 = vunpack.c.l.b16 %v1072
    %v1105 = vunpack.c.l.b16 %v1073
    %v1106 = vunpack.c.l.b16 %v1074
    %v1107 = vunpack.c.l.b16 %v1075
    %v1108 = vunpack.c.l.b16 %v1076
    %v1109 = vunpack.c.l.b16 %v1077
    %v1110 = vunpack.c.l.b16 %v1078
    %v1111 = vunpack.c.l.b16 %v1079
    %v1112 = vunpack.c.l.b16 %v1080
    %v1113 = vpack.c.b16 %v1098, %v1097
    %v1114 = vpack.c.b16 %v1100, %v1099
    %v1115 = vpack.c.b16 %v1102, %v1101
    %v1116 = vpack.c.b16 %v1104, %v1103
    %v1117 = vpack.c.b16 %v1106, %v1105
    %v1118 = vpack.c.b16 %v1108, %v1107
    %v1119 = vpack.c.b16 %v1110, %v1109
    %v1120 = vpack.c.b16 %v1112, %v1111
    %1129 = vmatprep.subr.bf16.mxu0 0
    %1130 = vmatpush1.bf16.msra.mxu0 %v1113
    %1131 = vmatprep.subr.bf16.mxu0 0
    %1132 = vmatpush1.bf16.msra.mxu0 %v1114
    %1133 = vmatprep.subr.bf16.mxu0 0
    %1134 = vmatpush1.bf16.msra.mxu0 %v1115
    %1135 = vmatprep.subr.bf16.mxu0 0
    %1136 = vmatpush1.bf16.msra.mxu0 %v1116
    %1137 = vmatprep.subr.bf16.mxu0 0
    %1138 = vmatpush1.bf16.msra.mxu0 %v1117
    %1139 = vmatprep.subr.bf16.mxu0 0
    %1140 = vmatpush1.bf16.msra.mxu0 %v1118
    %1141 = vmatprep.subr.bf16.mxu0 0
    %1142 = vmatpush1.bf16.msra.mxu0 %v1119
    %1143 = vmatprep.subr.bf16.mxu0 0
    %1144 = vmatpush1.bf16.msra.mxu0 %v1120
    %1145 = vmatprep.subr.bf16.mxu0 0
    %1146 = vmatpush1.bf16.msra.mxu0 0
    %1147 = vmatprep.subr.bf16.mxu0 0
    %1148 = vmatpush1.bf16.msra.mxu0 0
    %1149 = vmatprep.subr.bf16.mxu0 0
    %1150 = vmatpush1.bf16.msra.mxu0 0
    %1151 = vmatprep.subr.bf16.mxu0 0
    %1152 = vmatpush1.bf16.msra.mxu0 0
    %1153 = vmatprep.subr.bf16.mxu0 0
    %1154 = vmatpush1.bf16.msra.mxu0 0
    %1155 = vmatprep.subr.bf16.mxu0 0
    %1156 = vmatpush1.bf16.msra.mxu0 0
    %1157 = vmatprep.subr.bf16.mxu0 0
    %1158 = vmatpush1.bf16.msra.mxu0 0
    %1159 = vmatprep.subr.bf16.mxu0 0
    %1160 = vmatpush1.bf16.msra.mxu0 0
    %1161 = vmatprep.mubr.bf16.mxu0 0
    %1162 = vmatmul.mubr.bf16.gmra.mrb[0].mxu0 %v1057
    %v1163 = vpop.f32.mrb[0].mxu0
    %v1164 = vadd.f32 0.0, %v1163
    %v1165 = vpop.f32.mrb[0].mxu0
    %v1166 = vpop.f32.mrb[0].mxu0
    %v1167 = vadd.f32 0.0, %v1166
    %v1168 = vpop.f32.mrb[0].mxu0
    %1169 = vmatprep.mubr.bf16.mxu0 0
    %1170 = vmatmul.mubr.bf16.gmra.mrb[0].mxu0 %v1058
    %v1171 = vpop.f32.mrb[0].mxu0
    %v1172 = vadd.f32 0.0, %v1171
    %v1173 = vpop.f32.mrb[0].mxu0
    %v1174 = vpop.f32.mrb[0].mxu0
    %v1175 = vadd.f32 0.0, %v1174
    %v1176 = vpop.f32.mrb[0].mxu0
    %1177 = vmatprep.mubr.bf16.mxu0 0
    %1178 = vmatmul.mubr.bf16.gmra.mrb[0].mxu0 %v1059
    %v1179 = vpop.f32.mrb[0].mxu0
    %v1180 = vadd.f32 0.0, %v1179
    %v1181 = vpop.f32.mrb[0].mxu0
    %v1182 = vpop.f32.mrb[0].mxu0
    %v1183 = vadd.f32 0.0, %v1182
    %v1184 = vpop.f32.mrb[0].mxu0
    %1185 = vmatprep.mubr.bf16.mxu0 0
    %1186 = vmatmul.mubr.bf16.gmra.mrb[0].mxu0 %v1060
    %v1187 = vpop.f32.mrb[0].mxu0
    %v1188 = vadd.f32 0.0, %v1187
    %v1189 = vpop.f32.mrb[0].mxu0
    %v1190 = vpop.f32.mrb[0].mxu0
    %v1191 = vadd.f32 0.0, %v1190
    %v1192 = vpop.f32.mrb[0].mxu0
    %1193 = vmatprep.mubr.bf16.mxu0 0
    %1194 = vmatmul.mubr.bf16.gmra.mrb[0].mxu0 %v1061
    %v1195 = vpop.f32.mrb[0].mxu0
    %v1196 = vadd.f32 0.0, %v1195
    %v1197 = vpop.f32.mrb[0].mxu0
    %v1198 = vpop.f32.mrb[0].mxu0
    %v1199 = vadd.f32 0.0, %v1198
    %v1200 = vpop.f32.mrb[0].mxu0
    %1201 = vmatprep.mubr.bf16.mxu0 0
    %1202 = vmatmul.mubr.bf16.gmra.mrb[0].mxu0 %v1062
    %v1203 = vpop.f32.mrb[0].mxu0
    %v1204 = vadd.f32 0.0, %v1203
    %v1205 = vpop.f32.mrb[0].mxu0
    %v1206 = vpop.f32.mrb[0].mxu0
    %v1207 = vadd.f32 0.0, %v1206
    %v1208 = vpop.f32.mrb[0].mxu0
    %1209 = vmatprep.mubr.bf16.mxu0 0
    %1210 = vmatmul.mubr.bf16.gmra.mrb[0].mxu0 %v1063
    %v1211 = vpop.f32.mrb[0].mxu0
    %v1212 = vadd.f32 0.0, %v1211
    %v1213 = vpop.f32.mrb[0].mxu0
    %v1214 = vpop.f32.mrb[0].mxu0
    %v1215 = vadd.f32 0.0, %v1214
    %v1216 = vpop.f32.mrb[0].mxu0
    %1217 = vmatprep.mubr.bf16.mxu0 0
    %1218 = vmatmul.mubr.bf16.gmra.mrb[0].mxu0 %v1064
    %v1219 = vpop.f32.mrb[0].mxu0
    %v1220 = vadd.f32 0.0, %v1219
    %v1221 = vpop.f32.mrb[0].mxu0
    %v1222 = vpop.f32.mrb[0].mxu0
    %v1223 = vadd.f32 0.0, %v1222
    %v1224 = vpop.f32.mrb[0].mxu0
    %1225 = vdwg.mxu0
    %v1226 = vpack.c.bf16 %v1167, %v1164
    %v1227 = vpack.c.bf16 %v1175, %v1172
    %v1228 = vpack.c.bf16 %v1183, %v1180
    %v1229 = vpack.c.bf16 %v1191, %v1188
    %v1230 = vpack.c.bf16 %v1199, %v1196
    %v1231 = vpack.c.bf16 %v1207, %v1204
    %v1232 = vpack.c.bf16 %v1215, %v1212
    %v1233 = vpack.c.bf16 %v1223, %v1220
    %v1234 = vld [vmem:[%s8] sm:$0x1]
    %v1236 = vlaneseq
    %v1237 = vshrl.u32 %v1236, 7
    %v1238 = vsub.s32 0, %v1237
    %v1239 = vrot.slane %v1234, %v1238
    %1241 = vmatprep.subr.bf16.mxu0 0
    %1242 = vmatpush1.bf16.msra.mxu0 %v1226
    %1243 = vmatprep.subr.bf16.mxu0 0
    %1244 = vmatpush1.bf16.msra.mxu0 %v1227
    %1245 = vmatprep.subr.bf16.mxu0 0
    %1246 = vmatpush1.bf16.msra.mxu0 %v1228
    %1247 = vmatprep.subr.bf16.mxu0 0
    %1248 = vmatpush1.bf16.msra.mxu0 %v1229
    %1249 = vmatprep.subr.bf16.mxu0 0
    %1250 = vmatpush1.bf16.msra.mxu0 %v1230
    %1251 = vmatprep.subr.bf16.mxu0 0
    %1252 = vmatpush1.bf16.msra.mxu0 %v1231
    %1253 = vmatprep.subr.bf16.mxu0 0
    %1254 = vmatpush1.bf16.msra.mxu0 %v1232
    %1255 = vmatprep.subr.bf16.mxu0 0
    %1256 = vmatpush1.bf16.msra.mxu0 %v1233
    %1257 = vmatprep.subr.bf16.mxu0 0
    %1258 = vmatpush1.bf16.msra.mxu0 0
    %1259 = vmatprep.subr.bf16.mxu0 0
    %1260 = vmatpush1.bf16.msra.mxu0 0
    %1261 = vmatprep.subr.bf16.mxu0 0
    %1262 = vmatpush1.bf16.msra.mxu0 0
    %1263 = vmatprep.subr.bf16.mxu0 0
    %1264 = vmatpush1.bf16.msra.mxu0 0
    %1265 = vmatprep.subr.bf16.mxu0 0
    %1266 = vmatpush1.bf16.msra.mxu0 0
    %1267 = vmatprep.subr.bf16.mxu0 0
    %1268 = vmatpush1.bf16.msra.mxu0 0
    %1269 = vmatprep.subr.bf16.mxu0 0
    %1270 = vmatpush1.bf16.msra.mxu0 0
    %1271 = vmatprep.subr.bf16.mxu0 0
    %1272 = vmatpush1.bf16.msra.mxu0 0
    %1273 = vmatprep.mubr.bf16.mxu0 0
    %1274 = vmatmul.mubr.bf16.gmra.mrb[0].mxu0 %v328
    %v1275 = vpop.f32.mrb[0].mxu0
    %v1276 = vadd.f32 %v1239, %v1275
    %v1277 = vpop.f32.mrb[0].mxu0
    %v1278 = vpop.f32.mrb[0].mxu0
    %v1279 = vadd.f32 %v1239, %v1278
    %v1280 = vpop.f32.mrb[0].mxu0
    %1281 = vmatprep.mubr.bf16.mxu0 0
    %1282 = vmatmul.mubr.bf16.gmra.mrb[0].mxu0 %v329
    %v1283 = vpop.f32.mrb[0].mxu0
    %v1284 = vadd.f32 %v1239, %v1283
    %v1285 = vpop.f32.mrb[0].mxu0
    %v1286 = vpop.f32.mrb[0].mxu0
    %v1287 = vadd.f32 %v1239, %v1286
    %v1288 = vpop.f32.mrb[0].mxu0
    %1289 = vmatprep.mubr.bf16.mxu0 0
    %1290 = vmatmul.mubr.bf16.gmra.mrb[0].mxu0 %v330
    %v1291 = vpop.f32.mrb[0].mxu0
    %v1292 = vadd.f32 %v1239, %v1291
    %v1293 = vpop.f32.mrb[0].mxu0
    %v1294 = vpop.f32.mrb[0].mxu0
    %v1295 = vadd.f32 %v1239, %v1294
    %v1296 = vpop.f32.mrb[0].mxu0
    %1297 = vmatprep.mubr.bf16.mxu0 0
    %1298 = vmatmul.mubr.bf16.gmra.mrb[0].mxu0 %v331
    %v1299 = vpop.f32.mrb[0].mxu0
    %v1300 = vadd.f32 %v1239, %v1299
    %v1301 = vpop.f32.mrb[0].mxu0
    %v1302 = vpop.f32.mrb[0].mxu0
    %v1303 = vadd.f32 %v1239, %v1302
    %v1304 = vpop.f32.mrb[0].mxu0
    %1305 = vmatprep.mubr.bf16.mxu0 0
    %1306 = vmatmul.mubr.bf16.gmra.mrb[0].mxu0 %v332
    %v1307 = vpop.f32.mrb[0].mxu0
    %v1308 = vadd.f32 %v1239, %v1307
    %v1309 = vpop.f32.mrb[0].mxu0
    %v1310 = vpop.f32.mrb[0].mxu0
    %v1311 = vadd.f32 %v1239, %v1310
    %v1312 = vpop.f32.mrb[0].mxu0
    %1313 = vmatprep.mubr.bf16.mxu0 0
    %1314 = vmatmul.mubr.bf16.gmra.mrb[0].mxu0 %v333
    %v1315 = vpop.f32.mrb[0].mxu0
    %v1316 = vadd.f32 %v1239, %v1315
    %v1317 = vpop.f32.mrb[0].mxu0
    %v1318 = vpop.f32.mrb[0].mxu0
    %v1319 = vadd.f32 %v1239, %v1318
    %v1320 = vpop.f32.mrb[0].mxu0
    %1321 = vmatprep.mubr.bf16.mxu0 0
    %1322 = vmatmul.mubr.bf16.gmra.mrb[0].mxu0 %v334
    %v1323 = vpop.f32.mrb[0].mxu0
    %v1324 = vadd.f32 %v1239, %v1323
    %v1325 = vpop.f32.mrb[0].mxu0
    %v1326 = vpop.f32.mrb[0].mxu0
    %v1327 = vadd.f32 %v1239, %v1326
    %v1328 = vpop.f32.mrb[0].mxu0
    %1329 = vmatprep.mubr.bf16.mxu0 0
    %1330 = vmatmul.mubr.bf16.gmra.mrb[0].mxu0 %v335
    %v1331 = vpop.f32.mrb[0].mxu0
    %v1332 = vadd.f32 %v1239, %v1331
    %v1333 = vpop.f32.mrb[0].mxu0
    %v1334 = vpop.f32.mrb[0].mxu0
    %v1335 = vadd.f32 %v1239, %v1334
    %v1336 = vpop.f32.mrb[0].mxu0
    %1337 = vdwg.mxu0
    %v1338 = vld [vmem:[%s10] sm:$0xff]
    %v1339 = vld [vmem:[%s10 + $0x8] sm:$0xff]
    %v1340 = vld [vmem:[%s10 + $0x10] sm:$0xff]
    %v1341 = vld [vmem:[%s10 + $0x18] sm:$0xff]
    %v1342 = vld [vmem:[%s10 + $0x20] sm:$0xff]
    %v1343 = vld [vmem:[%s10 + $0x28] sm:$0xff]
    %v1344 = vld [vmem:[%s10 + $0x30] sm:$0xff]
    %v1345 = vld [vmem:[%s10 + $0x38] sm:$0xff]
    %v1346 = vld [vmem:[%s10 + $0x40] sm:$0xff]
    %v1347 = vld [vmem:[%s10 + $0x48] sm:$0xff]
    %v1348 = vld [vmem:[%s10 + $0x50] sm:$0xff]
    %v1349 = vld [vmem:[%s10 + $0x58] sm:$0xff]
    %v1350 = vld [vmem:[%s10 + $0x60] sm:$0xff]
    %v1351 = vld [vmem:[%s10 + $0x68] sm:$0xff]
    %v1352 = vld [vmem:[%s10 + $0x70] sm:$0xff]
    %v1353 = vld [vmem:[%s10 + $0x78] sm:$0xff]
    %v1354 = vmul.f32 %v1276, %v1276
    %v1355 = vmul.f32 %v1279, %v1279
    %v1356 = vmul.f32 %v1284, %v1284
    %v1357 = vmul.f32 %v1287, %v1287
    %v1358 = vmul.f32 %v1292, %v1292
    %v1359 = vmul.f32 %v1295, %v1295
    %v1360 = vmul.f32 %v1300, %v1300
    %v1361 = vmul.f32 %v1303, %v1303
    %v1362 = vmul.f32 %v1308, %v1308
    %v1363 = vmul.f32 %v1311, %v1311
    %v1364 = vmul.f32 %v1316, %v1316
    %v1365 = vmul.f32 %v1319, %v1319
    %v1366 = vmul.f32 %v1324, %v1324
    %v1367 = vmul.f32 %v1327, %v1327
    %v1368 = vmul.f32 %v1332, %v1332
    %v1369 = vmul.f32 %v1335, %v1335
    %1370 = vadd.xlane.f32.xlu0 %v1354
    %v1371 = vpop.xlane.xlu0 %1370
    %1372 = vadd.xlane.f32.xlu0 %v1355
    %v1373 = vpop.xlane.xlu0 %1372
    %1374 = vadd.xlane.f32.xlu0 %v1356
    %v1375 = vpop.xlane.xlu0 %1374
    %1376 = vadd.xlane.f32.xlu0 %v1357
    %v1377 = vpop.xlane.xlu0 %1376
    %1378 = vadd.xlane.f32.xlu0 %v1358
    %v1379 = vpop.xlane.xlu0 %1378
    %1380 = vadd.xlane.f32.xlu0 %v1359
    %v1381 = vpop.xlane.xlu0 %1380
    %1382 = vadd.xlane.f32.xlu0 %v1360
    %v1383 = vpop.xlane.xlu0 %1382
    %1384 = vadd.xlane.f32.xlu0 %v1361
    %v1385 = vpop.xlane.xlu0 %1384
    %1386 = vadd.xlane.f32.xlu0 %v1362
    %v1387 = vpop.xlane.xlu0 %1386
    %1388 = vadd.xlane.f32.xlu0 %v1363
    %v1389 = vpop.xlane.xlu0 %1388
    %1390 = vadd.xlane.f32.xlu0 %v1364
    %v1391 = vpop.xlane.xlu0 %1390
    %1392 = vadd.xlane.f32.xlu0 %v1365
    %v1393 = vpop.xlane.xlu0 %1392
    %1394 = vadd.xlane.f32.xlu0 %v1366
    %v1395 = vpop.xlane.xlu0 %1394
    %1396 = vadd.xlane.f32.xlu0 %v1367
    %v1397 = vpop.xlane.xlu0 %1396
    %1398 = vadd.xlane.f32.xlu0 %v1368
    %v1399 = vpop.xlane.xlu0 %1398
    %1400 = vadd.xlane.f32.xlu0 %v1369
    %v1401 = vpop.xlane.xlu0 %1400
    %v1402 = vmul.f32 %v1338, %v1338
    %v1403 = vmul.f32 %v1339, %v1339
    %v1404 = vmul.f32 %v1340, %v1340
    %v1405 = vmul.f32 %v1341, %v1341
    %v1406 = vmul.f32 %v1342, %v1342
    %v1407 = vmul.f32 %v1343, %v1343
    %v1408 = vmul.f32 %v1344, %v1344
    %v1409 = vmul.f32 %v1345, %v1345
    %v1410 = vmul.f32 %v1346, %v1346
    %v1411 = vmul.f32 %v1347, %v1347
    %v1412 = vmul.f32 %v1348, %v1348
    %v1413 = vmul.f32 %v1349, %v1349
    %v1414 = vmul.f32 %v1350, %v1350
    %v1415 = vmul.f32 %v1351, %v1351
    %v1416 = vmul.f32 %v1352, %v1352
    %v1417 = vmul.f32 %v1353, %v1353
    %1418 = vadd.xlane.f32.xlu0 %v1402
    %v1419 = vpop.xlane.xlu0 %1418
    %1420 = vadd.xlane.f32.xlu0 %v1403
    %v1421 = vpop.xlane.xlu0 %1420
    %1422 = vadd.xlane.f32.xlu0 %v1404
    %v1423 = vpop.xlane.xlu0 %1422
    %1424 = vadd.xlane.f32.xlu0 %v1405
    %v1425 = vpop.xlane.xlu0 %1424
    %1426 = vadd.xlane.f32.xlu0 %v1406
    %v1427 = vpop.xlane.xlu0 %1426
    %1428 = vadd.xlane.f32.xlu0 %v1407
    %v1429 = vpop.xlane.xlu0 %1428
    %1430 = vadd.xlane.f32.xlu0 %v1408
    %v1431 = vpop.xlane.xlu0 %1430
    %1432 = vadd.xlane.f32.xlu0 %v1409
    %v1433 = vpop.xlane.xlu0 %1432
    %1434 = vadd.xlane.f32.xlu0 %v1410
    %v1435 = vpop.xlane.xlu0 %1434
    %1436 = vadd.xlane.f32.xlu0 %v1411
    %v1437 = vpop.xlane.xlu0 %1436
    %1438 = vadd.xlane.f32.xlu0 %v1412
    %v1439 = vpop.xlane.xlu0 %1438
    %1440 = vadd.xlane.f32.xlu0 %v1413
    %v1441 = vpop.xlane.xlu0 %1440
    %1442 = vadd.xlane.f32.xlu0 %v1414
    %v1443 = vpop.xlane.xlu0 %1442
    %1444 = vadd.xlane.f32.xlu0 %v1415
    %v1445 = vpop.xlane.xlu0 %1444
    %1446 = vadd.xlane.f32.xlu0 %v1416
    %v1447 = vpop.xlane.xlu0 %1446
    %1448 = vadd.xlane.f32.xlu0 %v1417
    %v1449 = vpop.xlane.xlu0 %1448
    %v1450 = vmax.f32 %v1371, 1e-24
    %v1451 = vmax.f32 %v1373, 1e-24
    %v1452 = vmax.f32 %v1375, 1e-24
    %v1453 = vmax.f32 %v1377, 1e-24
    %v1454 = vmax.f32 %v1379, 1e-24
    %v1455 = vmax.f32 %v1381, 1e-24
    %v1456 = vmax.f32 %v1383, 1e-24
    %v1457 = vmax.f32 %v1385, 1e-24
    %v1458 = vmax.f32 %v1387, 1e-24
    %v1459 = vmax.f32 %v1389, 1e-24
    %v1460 = vmax.f32 %v1391, 1e-24
    %v1461 = vmax.f32 %v1393, 1e-24
    %v1462 = vmax.f32 %v1395, 1e-24
    %v1463 = vmax.f32 %v1397, 1e-24
    %v1464 = vmax.f32 %v1399, 1e-24
    %v1465 = vmax.f32 %v1401, 1e-24
    %v1466 = vrsqrt.pop %v1450
    %v1467 = vrsqrt.pop %v1451
    %v1468 = vrsqrt.pop %v1452
    %v1469 = vrsqrt.pop %v1453
    %v1470 = vrsqrt.pop %v1454
    %v1471 = vrsqrt.pop %v1455
    %v1472 = vrsqrt.pop %v1456
    %v1473 = vrsqrt.pop %v1457
    %v1474 = vrsqrt.pop %v1458
    %v1475 = vrsqrt.pop %v1459
    %v1476 = vrsqrt.pop %v1460
    %v1477 = vrsqrt.pop %v1461
    %v1478 = vrsqrt.pop %v1462
    %v1479 = vrsqrt.pop %v1463
    %v1480 = vrsqrt.pop %v1464
    %v1481 = vrsqrt.pop %v1465
    %v1482 = vmax.f32 %v1419, 1e-24
    %v1483 = vmax.f32 %v1421, 1e-24
    %v1484 = vmax.f32 %v1423, 1e-24
    %v1485 = vmax.f32 %v1425, 1e-24
    %v1486 = vmax.f32 %v1427, 1e-24
    %v1487 = vmax.f32 %v1429, 1e-24
    %v1488 = vmax.f32 %v1431, 1e-24
    %v1489 = vmax.f32 %v1433, 1e-24
    %v1490 = vmax.f32 %v1435, 1e-24
    %v1491 = vmax.f32 %v1437, 1e-24
    %v1492 = vmax.f32 %v1439, 1e-24
    %v1493 = vmax.f32 %v1441, 1e-24
    %v1494 = vmax.f32 %v1443, 1e-24
    %v1495 = vmax.f32 %v1445, 1e-24
    %v1496 = vmax.f32 %v1447, 1e-24
    %v1497 = vmax.f32 %v1449, 1e-24
    %v1498 = vrsqrt.pop %v1482
    %v1499 = vrsqrt.pop %v1483
    %v1500 = vrsqrt.pop %v1484
    %v1501 = vrsqrt.pop %v1485
    %v1502 = vrsqrt.pop %v1486
    %v1503 = vrsqrt.pop %v1487
    %v1504 = vrsqrt.pop %v1488
    %v1505 = vrsqrt.pop %v1489
    %v1506 = vrsqrt.pop %v1490
    %v1507 = vrsqrt.pop %v1491
    %v1508 = vrsqrt.pop %v1492
    %v1509 = vrsqrt.pop %v1493
    %v1510 = vrsqrt.pop %v1494
    %v1511 = vrsqrt.pop %v1495
    %v1512 = vrsqrt.pop %v1496
    %v1513 = vrsqrt.pop %v1497
    %v1514 = vmul.f32 %v1276, %v1338
    %v1515 = vmul.f32 %v1279, %v1339
    %v1516 = vmul.f32 %v1284, %v1340
    %v1517 = vmul.f32 %v1287, %v1341
    %v1518 = vmul.f32 %v1292, %v1342
    %v1519 = vmul.f32 %v1295, %v1343
    %v1520 = vmul.f32 %v1300, %v1344
    %v1521 = vmul.f32 %v1303, %v1345
    %v1522 = vmul.f32 %v1308, %v1346
    %v1523 = vmul.f32 %v1311, %v1347
    %v1524 = vmul.f32 %v1316, %v1348
    %v1525 = vmul.f32 %v1319, %v1349
    %v1526 = vmul.f32 %v1324, %v1350
    %v1527 = vmul.f32 %v1327, %v1351
    %v1528 = vmul.f32 %v1332, %v1352
    %v1529 = vmul.f32 %v1335, %v1353
    %1530 = vadd.xlane.f32.xlu0 %v1514
    %v1531 = vpop.xlane.xlu0 %1530
    %1532 = vadd.xlane.f32.xlu0 %v1515
    %v1533 = vpop.xlane.xlu0 %1532
    %1534 = vadd.xlane.f32.xlu0 %v1516
    %v1535 = vpop.xlane.xlu0 %1534
    %1536 = vadd.xlane.f32.xlu0 %v1517
    %v1537 = vpop.xlane.xlu0 %1536
    %1538 = vadd.xlane.f32.xlu0 %v1518
    %v1539 = vpop.xlane.xlu0 %1538
    %1540 = vadd.xlane.f32.xlu0 %v1519
    %v1541 = vpop.xlane.xlu0 %1540
    %1542 = vadd.xlane.f32.xlu0 %v1520
    %v1543 = vpop.xlane.xlu0 %1542
    %1544 = vadd.xlane.f32.xlu0 %v1521
    %v1545 = vpop.xlane.xlu0 %1544
    %1546 = vadd.xlane.f32.xlu0 %v1522
    %v1547 = vpop.xlane.xlu0 %1546
    %1548 = vadd.xlane.f32.xlu0 %v1523
    %v1549 = vpop.xlane.xlu0 %1548
    %1550 = vadd.xlane.f32.xlu0 %v1524
    %v1551 = vpop.xlane.xlu0 %1550
    %1552 = vadd.xlane.f32.xlu0 %v1525
    %v1553 = vpop.xlane.xlu0 %1552
    %1554 = vadd.xlane.f32.xlu0 %v1526
    %v1555 = vpop.xlane.xlu0 %1554
    %1556 = vadd.xlane.f32.xlu0 %v1527
    %v1557 = vpop.xlane.xlu0 %1556
    %1558 = vadd.xlane.f32.xlu0 %v1528
    %v1559 = vpop.xlane.xlu0 %1558
    %1560 = vadd.xlane.f32.xlu0 %v1529
    %v1561 = vpop.xlane.xlu0 %1560
    %v1562 = vmul.f32 %v1531, %v1466
    %v1563 = vmul.f32 %v1533, %v1467
    %v1564 = vmul.f32 %v1535, %v1468
    %v1565 = vmul.f32 %v1537, %v1469
    %v1566 = vmul.f32 %v1539, %v1470
    %v1567 = vmul.f32 %v1541, %v1471
    %v1568 = vmul.f32 %v1543, %v1472
    %v1569 = vmul.f32 %v1545, %v1473
    %v1570 = vmul.f32 %v1547, %v1474
    %v1571 = vmul.f32 %v1549, %v1475
    %v1572 = vmul.f32 %v1551, %v1476
    %v1573 = vmul.f32 %v1553, %v1477
    %v1574 = vmul.f32 %v1555, %v1478
    %v1575 = vmul.f32 %v1557, %v1479
    %v1576 = vmul.f32 %v1559, %v1480
    %v1577 = vmul.f32 %v1561, %v1481
    %v1578 = vmul.f32 %v1562, %v1498
    %v1579 = vmul.f32 %v1563, %v1499
    %v1580 = vmul.f32 %v1564, %v1500
    %v1581 = vmul.f32 %v1565, %v1501
    %v1582 = vmul.f32 %v1566, %v1502
    %v1583 = vmul.f32 %v1567, %v1503
    %v1584 = vmul.f32 %v1568, %v1504
    %v1585 = vmul.f32 %v1569, %v1505
    %v1586 = vmul.f32 %v1570, %v1506
    %v1587 = vmul.f32 %v1571, %v1507
    %v1588 = vmul.f32 %v1572, %v1508
    %v1589 = vmul.f32 %v1573, %v1509
    %v1590 = vmul.f32 %v1574, %v1510
    %v1591 = vmul.f32 %v1575, %v1511
    %v1592 = vmul.f32 %v1576, %v1512
    %v1593 = vmul.f32 %v1577, %v1513
    %v1594 = vsub.f32 1.0, %v1578
    %v1595 = vsub.f32 1.0, %v1579
    %v1596 = vsub.f32 1.0, %v1580
    %v1597 = vsub.f32 1.0, %v1581
    %v1598 = vsub.f32 1.0, %v1582
    %v1599 = vsub.f32 1.0, %v1583
    %v1600 = vsub.f32 1.0, %v1584
    %v1601 = vsub.f32 1.0, %v1585
    %v1602 = vsub.f32 1.0, %v1586
    %v1603 = vsub.f32 1.0, %v1587
    %v1604 = vsub.f32 1.0, %v1588
    %v1605 = vsub.f32 1.0, %v1589
    %v1606 = vsub.f32 1.0, %v1590
    %v1607 = vsub.f32 1.0, %v1591
    %v1608 = vsub.f32 1.0, %v1592
    %v1609 = vsub.f32 1.0, %v1593
    %v1610 = vmul.f32 %v1594, %v1594
    %v1611 = vmul.f32 %v1595, %v1595
    %v1612 = vmul.f32 %v1596, %v1596
    %v1613 = vmul.f32 %v1597, %v1597
    %v1614 = vmul.f32 %v1598, %v1598
    %v1615 = vmul.f32 %v1599, %v1599
    %v1616 = vmul.f32 %v1600, %v1600
    %v1617 = vmul.f32 %v1601, %v1601
    %v1618 = vmul.f32 %v1602, %v1602
    %v1619 = vmul.f32 %v1603, %v1603
    %v1620 = vmul.f32 %v1604, %v1604
    %v1621 = vmul.f32 %v1605, %v1605
    %v1622 = vmul.f32 %v1606, %v1606
    %v1623 = vmul.f32 %v1607, %v1607
    %v1624 = vmul.f32 %v1608, %v1608
    %v1625 = vmul.f32 %v1609, %v1609
    %v1626 = vmul.f32 %v1610, %v994
    %v1627 = vmul.f32 %v1611, %v996
    %v1628 = vmul.f32 %v1612, %v998
    %v1629 = vmul.f32 %v1613, %v1000
    %v1630 = vmul.f32 %v1614, %v1002
    %v1631 = vmul.f32 %v1615, %v1004
    %v1632 = vmul.f32 %v1616, %v1006
    %v1633 = vmul.f32 %v1617, %v1008
    %v1634 = vmul.f32 %v1618, %v1010
    %v1635 = vmul.f32 %v1619, %v1012
    %v1636 = vmul.f32 %v1620, %v1014
    %v1637 = vmul.f32 %v1621, %v1016
    %v1638 = vmul.f32 %v1622, %v1018
    %v1639 = vmul.f32 %v1623, %v1020
    %v1640 = vmul.f32 %v1624, %v1022
    %v1641 = vmul.f32 %v1625, %v1024
    %v1642 = vadd.f32 %v1626, %v1627
    %v1643 = vadd.f32 %v1642, %v1628
    %v1644 = vadd.f32 %v1643, %v1629
    %v1645 = vadd.f32 %v1644, %v1630
    %v1646 = vadd.f32 %v1645, %v1631
    %v1647 = vadd.f32 %v1646, %v1632
    %v1648 = vadd.f32 %v1647, %v1633
    %v1649 = vadd.f32 %v1648, %v1634
    %v1650 = vadd.f32 %v1649, %v1635
    %v1651 = vadd.f32 %v1650, %v1636
    %v1652 = vadd.f32 %v1651, %v1637
    %v1653 = vadd.f32 %v1652, %v1638
    %v1654 = vadd.f32 %v1653, %v1639
    %v1655 = vadd.f32 %v1654, %v1640
    %v1656 = vadd.f32 %v1655, %v1641
    %v1657 = vrot.slane %v1656, 4
    %v1658 = vadd.f32 %v1656, %v1657
    %v1659 = vrot.slane %v1658, 2
    %v1660 = vadd.f32 %v1658, %v1659
    %v1661 = vrot.slane %v1660, 1
    %v1662 = vadd.f32 %v1660, %v1661
    %v1663 = vmul.f32 %v1662, 0.041666668
    %1664 = vst [vmem:[#allocation2] sm:$0x1] %v1663
    // Predicated region
    $region46: #{premodel_forward.1} parent=1 // pred_check
      _
    $region47: #{premodel_forward.1} parent=1 // pred_check_branch
      %1666 = sbr.rel (0) target = $region49
    $region48: #{premodel_forward.1} parent=1 // pred_region
      %s1668 = ssub.s32 16, 16
      %1669 = vsyncadd [#allocation3], %s1668
      %s1671 = sshll.u32 [#allocation2], 4
      %s1672 = int_to_ptr.vmem [resolvable:$true] %s1671
      %1674 = dma.vmem_to_hbm [thread:$0]  %s1672, 16, %s11, [#allocation3]
    $region49: #{premodel_forward.1} parent=1 // pred_fallthru
      _
    // Predicated region
    $region50: #{premodel_forward.1} parent=1 // pred_check
      _
    $region51: #{premodel_forward.1} parent=1 // pred_check_branch
      %1676 = sbr.rel (0) target = $region53
    $region52: #{premodel_forward.1} parent=1 // pred_region
      %1677 = dma.done [#allocation3], 16
    $region53: #{premodel_forward.1} parent=1 // pred_fallthru
      _
    %1678 = vsyncpa [#allocation3], 1

</llo_original>
